<compile_context>
chip_gen: v7x
topology: tpu7x:2x2x1
jax: 0.10.0
libtpu: 0.0.40
codegen_flags: <defaults>
</compile_context>

<pallas_src>
import functools

import jax
import jax.numpy as jnp
from jax.experimental import pallas as pl
from jax.experimental.pallas import tpu as pltpu

_MIB = 1024 * 1024


def _lrelu(v):
    # F.leaky_relu default negative_slope = 0.01
    return jnp.where(v > 0, v, 0.01 * v)


def _round_up(n, m):
    return ((n + m - 1) // m) * m


def _vmem_capacity_bytes():
    """Per-generation VMEM capacity (64 MiB on v7x, 128 MiB on v5e/v6e)."""
    try:
        return int(pltpu.get_tpu_info().vmem_capacity_bytes)
    except Exception:
        return 64 * _MIB  # conservative fallback (v7x per-TensorCore VMEM)


def _bottleneck(h1, noise_p, w2, b2, wmv, bmv, wd, bd, w3, b3, *,
                pad_l, min_log_std, max_log_std):
    """Encoder tail + reparameterisation + decoder front (tiny, serial).

    All lane slices are 128-aligned: the fused (mean | log_var) projection pads
    each half to `pad_l` (>=128) lanes, so mean lives in cols [0, pad_l) and
    log_var in cols [pad_l, 2*pad_l).
    """
    h2 = _lrelu(jnp.dot(h1.astype(jnp.bfloat16), w2,
                        preferred_element_type=jnp.float32) + b2)            # (B, 64)
    mv = jnp.dot(h2.astype(jnp.bfloat16), wmv,
                 preferred_element_type=jnp.float32) + bmv                   # (B, 2*pad_l)
    col = jax.lax.broadcasted_iota(jnp.int32, mv.shape, 1)
    # Clamp only the log_var half (matches torch.clamp on z_log_var output).
    zstat = jnp.where(col >= pad_l, jnp.clip(mv, min_log_std, max_log_std), mv)
    mean_p = zstat[:, :pad_l]            # 128-aligned static slices (free)
    logvar_p = zstat[:, pad_l:]
    # Padded lanes: mean_p/logvar_p are exactly 0 there and noise_p is 0,
    # so z is 0 in padded lanes -> no effect on the (padded-row) wd matmul.
    z = noise_p * jnp.exp(0.5 * logvar_p) + mean_p                           # (B, pad_l)
    d1 = _lrelu(jnp.dot(z.astype(jnp.bfloat16), wd,
                        preferred_element_type=jnp.float32) + bd)            # (B, 64)
    d2 = _lrelu(jnp.dot(d1.astype(jnp.bfloat16), w3,
                        preferred_element_type=jnp.float32) + b3)            # (B, 256)
    return d2, zstat


# ----------------------------- fast path kernel ------------------------------
def _fused_kernel(x_ref, noise_ref, w1_ref, b1_ref, w2_ref, b2_ref,
                  wmv_ref, bmv_ref, wd_ref, bd_ref, w3_ref, b3_ref,
                  w4_ref, b4_ref, out_ref, zstat_ref, *,
                  pad_l, min_log_std, max_log_std):
    h1 = _lrelu(jnp.dot(x_ref[...], w1_ref[...],
                        preferred_element_type=jnp.float32) + b1_ref[...])   # (B, 256)
    d2, zstat = _bottleneck(h1, noise_ref[...], w2_ref[...], b2_ref[...],
                            wmv_ref[...], bmv_ref[...], wd_ref[...],
                            bd_ref[...], w3_ref[...], b3_ref[...],
                            pad_l=pad_l, min_log_std=min_log_std,
                            max_log_std=max_log_std)
    zstat_ref[...] = zstat
    # mode == 'continuous' -> no sigmoid on the final layer.
    out_ref[...] = (jnp.dot(d2.astype(jnp.bfloat16), w4_ref[...],
                            preferred_element_type=jnp.float32) + b4_ref[...])


# --------------------------- streamed path kernels ---------------------------
def _encoder_kernel(x_ref, noise_ref, w1_ref, b1_ref, w2_ref, b2_ref,
                    wmv_ref, bmv_ref, wd_ref, bd_ref, w3_ref, b3_ref,
                    d2_ref, zstat_ref, acc_ref, *,
                    pad_l, min_log_std, max_log_std):
    j = pl.program_id(0)

    @pl.when(j == 0)
    def _init():
        acc_ref[...] = jnp.zeros_like(acc_ref)

    # Partial x_blk @ w1_blk, accumulated in f32 (bf16 operands, f32 MXU acc).
    acc_ref[...] += jnp.dot(x_ref[...], w1_ref[...],
                            preferred_element_type=jnp.float32)

    @pl.when(j == pl.num_programs(0) - 1)
    def _tail():
        h1 = _lrelu(acc_ref[...] + b1_ref[...])
        d2, zstat = _bottleneck(h1, noise_ref[...], w2_ref[...], b2_ref[...],
                                wmv_ref[...], bmv_ref[...], wd_ref[...],
                                bd_ref[...], w3_ref[...], b3_ref[...],
                                pad_l=pad_l, min_log_std=min_log_std,
                                max_log_std=max_log_std)
        d2_ref[...] = d2.astype(d2_ref.dtype)
        zstat_ref[...] = zstat


def _decoder_kernel(d2_ref, w4_ref, b4_ref, out_ref):
    # One D-block of the reconstruction; bias add folded into the writeback.
    out_ref[...] = (jnp.dot(d2_ref[...], w4_ref[...],
                            preferred_element_type=jnp.float32) + b4_ref[...])


# --------------------------------- wrapper -----------------------------------
def mlp_vae_forward(x, noise, params, n_channels, input_dim, latent_dim,
                    min_log_std=-20.0, max_log_std=2.0,
                    force_streamed=False, d_block_override=None):
    B = x.shape[0]
    D = n_channels * input_dim * input_dim
    L = latent_dim
    pad_l = max(128, _round_up(L, 128))          # lane-dense mean/log_var halves
    f32, bf16 = jnp.float32, jnp.bfloat16

    # x.view(B, -1); bf16 data path (documented accuracy compromise: weights and
    # the input itself run in bf16 on-chip, accumulation stays f32).
    x_flat = x.reshape(B, D).astype(bf16)
    noise_p = jnp.zeros((B, pad_l), f32).at[:, :L].set(noise.astype(f32))

    w1, b1 = params["encoder_hidden"]
    w2, b2 = params["l1"]
    wm, bm = params["z_mean"]
    wv, bv = params["z_log_var"]
    wd, bd = params["z_develop"]
    w3, b3 = params["l2"]
    w4, b4 = params["decoder_hidden"]

    # Fused, lane-padded (mean | log_var) projection.
    wmv = (jnp.zeros((64, 2 * pad_l), f32)
           .at[:, :L].set(wm).at[:, pad_l:pad_l + L].set(wv))
    bmv = (jnp.zeros((1, 2 * pad_l), f32)
           .at[:, :L].set(bm).at[:, pad_l:pad_l + L].set(bv))
    wd_p = jnp.zeros((pad_l, 64), f32).at[:L, :].set(wd)

    # bf16 weights (hoist these casts into parameter init in production).
    w1b, w2b, wmvb, wdb, w3b, w4b = (a.astype(bf16)
                                     for a in (w1, w2, wmv, wd_p, w3, w4))
    b1f, b2f, bmvf, bdf, b3f, b4f = (a.astype(f32)
                                     for a in (b1, b2, bmv, bd, b3, b4))

    # ------------------ VMEM budgeting (per chip generation) ------------------
    vmem_cap = _vmem_capacity_bytes()                 # 64 MiB v7x / 128 MiB v5e,v6e
    usable = vmem_cap // 2                            # working-set budget w/ headroom
    vmem_limit = min(vmem_cap - 12 * _MIB, usable + 12 * _MIB)
    vmem_limit = int(max(vmem_limit, 24 * _MIB))

    small_bytes = (256 * 64 * 2 + 64 * 2 * pad_l * 2 + pad_l * 64 * 2
                   + 64 * 256 * 2 + (256 + 64 + 2 * pad_l + 64 + 256) * 4
                   + B * pad_l * 4 + B * 2 * pad_l * 4 + B * 256 * 6)
    fast_bytes = (B * D * 2            # x (bf16)
                  + D * 256 * 2        # w1 (bf16)
                  + 256 * D * 2        # w4 (bf16)
                  + D * 4              # b4 (f32)
                  + B * D * 4          # out (f32)
                  + small_bytes)
    use_fast = (not force_streamed) and int(fast_bytes * 1.3) <= usable

    kernel_kw = dict(pad_l=pad_l, min_log_std=float(min_log_std),
                     max_log_std=float(max_log_std))

    if use_fast:
        # ---------------- fast path: single un-gridded call ----------------
        vmem_full = pl.BlockSpec(memory_space=pltpu.MemorySpace.VMEM)
        out_flat, zstat = pl.pallas_call(
            functools.partial(_fused_kernel, **kernel_kw),
            out_shape=(jax.ShapeDtypeStruct((B, D), f32),
                       jax.ShapeDtypeStruct((B, 2 * pad_l), f32)),
            in_specs=[vmem_full] * 14,
            out_specs=(vmem_full, vmem_full),
            compiler_params=pltpu.CompilerParams(vmem_limit_bytes=vmem_limit),
        )(x_flat, noise_p, w1b, b1f, w2b, b2f, wmvb, bmvf, wdb, bdf,
          w3b, b3f, w4b, b4f)
        out = out_flat.reshape(B, n_channels, input_dim, input_dim)
        return out, zstat[:, :L], zstat[:, pad_l:pad_l + L]

    # ------------------- streamed path: two pipelined calls -------------------
    if d_block_override is not None:
        d_block = int(d_block_override)
        assert d_block % 128 == 0 and d_block > 0
    else:
        # Double-buffered per-step bytes per D row (max of encoder / decoder step).
        per_row = 2 * (256 * 2 + 4 + 4 * B) + 16
        d_block = max(128, ((usable - 4 * _MIB) // per_row) // 128 * 128)
        d_block = min(d_block, _round_up(D, 128))

    Dp = _round_up(D, d_block)
    nblk = Dp // d_block
    if Dp != D:
        pad = Dp - D
        x_flat = jnp.pad(x_flat, ((0, 0), (0, pad)))
        w1b = jnp.pad(w1b, ((0, pad), (0, 0)))
        w4b = jnp.pad(w4b, ((0, 0), (0, pad)))
        b4f = jnp.pad(b4f, ((0, 0), (0, pad)))

    fixed = lambda j: (0, 0)

    # ---- call 1: encoder K-reduction over D blocks + tiny bottleneck ----
    enc_in_specs = [
        pl.BlockSpec((B, d_block), lambda j: (0, j)),       # x (bf16, streamed)
        pl.BlockSpec((B, pad_l), fixed),                    # noise
        pl.BlockSpec((d_block, 256), lambda j: (j, 0)),     # w1 (bf16, streamed)
        pl.BlockSpec((1, 256), fixed),                      # b1
        pl.BlockSpec((256, 64), fixed),                     # w2
        pl.BlockSpec((1, 64), fixed),                       # b2
        pl.BlockSpec((64, 2 * pad_l), fixed),               # wmv
        pl.BlockSpec((1, 2 * pad_l), fixed),                # bmv
        pl.BlockSpec((pad_l, 64), fixed),                   # wd
        pl.BlockSpec((1, 64), fixed),                       # bd
        pl.BlockSpec((64, 256), fixed),                     # w3
        pl.BlockSpec((1, 256), fixed),                      # b3
    ]
    d2, zstat = pl.pallas_call(
        functools.partial(_encoder_kernel, **kernel_kw),
        out_shape=(jax.ShapeDtypeStruct((B, 256), bf16),
                   jax.ShapeDtypeStruct((B, 2 * pad_l), f32)),
        grid_spec=pltpu.PrefetchScalarGridSpec(
            num_scalar_prefetch=0, grid=(nblk,),
            in_specs=enc_in_specs,
            out_specs=(pl.BlockSpec((B, 256), fixed),
                       pl.BlockSpec((B, 2 * pad_l), fixed)),
            scratch_shapes=[pltpu.VMEM((B, 256), jnp.float32)]),
        compiler_params=pltpu.CompilerParams(
            dimension_semantics=("arbitrary",), vmem_limit_bytes=vmem_limit),
    )(x_flat, noise_p, w1b, b1f, w2b, b2f, wmvb, bmvf, wdb, bdf, w3b, b3f)

    # ---- call 2: decoder N-streaming over D blocks ("parallel" => both ----
    # ---- TensorCores on v7x each emit half of the reconstruction)      ----
    out_flat = pl.pallas_call(
        _decoder_kernel,
        out_shape=jax.ShapeDtypeStruct((B, Dp), f32),
        grid_spec=pltpu.PrefetchScalarGridSpec(
            num_scalar_prefetch=0, grid=(nblk,),
            in_specs=[pl.BlockSpec((B, 256), fixed),                    # d2 (bf16)
                      pl.BlockSpec((256, d_block), lambda j: (0, j)),   # w4 (streamed)
                      pl.BlockSpec((1, d_block), lambda j: (0, j))],    # b4 (streamed)
            out_specs=pl.BlockSpec((B, d_block), lambda j: (0, j))),
        compiler_params=pltpu.CompilerParams(
            dimension_semantics=("parallel",), vmem_limit_bytes=vmem_limit),
    )(d2, w4b, b4f)

    out = out_flat[:, :D].reshape(B, n_channels, input_dim, input_dim)
    return out, zstat[:, :L], zstat[:, pad_l:pad_l + L]


# ----------------------------- params / reference ----------------------------
def init_params(key, n_channels, input_dim, latent_dim):
    """Deterministic parameter init mimicking the PyTorch module's __init__ (f32)."""
    D = n_channels * input_dim * input_dim
    dims = [
        ("encoder_hidden", D, 256, None),
        ("l1", 256, 64, None),
        ("z_mean", 64, latent_dim, 0.003),
        ("z_log_var", 64, latent_dim, 0.003),
        ("z_develop", latent_dim, 64, None),
        ("l2", 64, 256, None),
        ("decoder_hidden", 256, D, 0.003),
    ]
    params = {}
    for name, fan_in, fan_out, bound in dims:
        key, kw, kb = jax.random.split(key, 3)
        lim = bound if bound is not None else 1.0 / float(fan_in) ** 0.5
        # weight stored as (in_features, out_features)  (== PyTorch W.T)
        w = jax.random.uniform(kw, (fan_in, fan_out), jnp.float32, -lim, lim)
        b = jax.random.uniform(kb, (1, fan_out), jnp.float32, -lim, lim)
        params[name] = (w, b)
    return params


def mlp_vae_reference(x, noise, params, n_channels, input_dim, latent_dim,
                      min_log_std=-20.0, max_log_std=2.0):
    """Pure-JAX f32 reference matching the PyTorch forward (continuous mode)."""
    B = x.shape[0]
    D = n_channels * input_dim * input_dim
    xf = x.reshape(B, D).astype(jnp.float32)
    w1, b1 = params["encoder_hidden"]
    w2, b2 = params["l1"]
    wm, bm = params["z_mean"]
    wv, bv = params["z_log_var"]
    wd, bd = params["z_develop"]
    w3, b3 = params["l2"]
    w4, b4 = params["decoder_hidden"]
    h = _lrelu(xf @ w1 + b1)
    h = _lrelu(h @ w2 + b2)
    mean = h @ wm + bm
    logvar = jnp.clip(h @ wv + bv, min_log_std, max_log_std)
    z = noise * jnp.exp(0.5 * logvar) + mean
    d = _lrelu(z @ wd + bd)
    d = _lrelu(d @ w3 + b3)
    out = d @ w4 + b4
    return out.reshape(B, n_channels, input_dim, input_dim), mean, logvar


if __name__ == "__main__":
    # Small shapes consistent with the module: batch=2, channels=4, spatial=16.
    B, C, H = 2, 4, 16
    latent_dim = 32

    key = jax.random.PRNGKey(0)
    k_x, k_noise, k_params = jax.random.split(key, 3)

    x = jax.random.normal(k_x, (B, C, H, H), jnp.float32)
    noise = jax.random.normal(k_noise, (B, latent_dim), jnp.float32)
    params = init_params(k_params, C, H, latent_dim)

    ref_out, ref_mean, ref_logvar = mlp_vae_reference(
        x, noise, params, C, H, latent_dim)

    # 1) Fast path (single un-gridded call) — the default for this shape.
    out, mean, logvar = mlp_vae_forward(x, noise, params, C, H, latent_dim)
    jax.block_until_ready((out, mean, logvar))
    assert out.shape == (B, C, H, H)
    assert mean.shape == (B, latent_dim)
    assert logvar.shape == (B, latent_dim)
    assert float(jnp.max(jnp.abs(out - ref_out))) < 5e-2
    assert float(jnp.max(jnp.abs(mean - ref_mean))) < 5e-2
    assert float(jnp.max(jnp.abs(logvar - ref_logvar))) < 5e-2

    # 2) Streamed path (forced, small d_block that does NOT divide D, to also
    #    exercise the D-padding + multi-block reduction + parallel decoder).
    out2, mean2, logvar2 = mlp_vae_forward(
        x, noise, params, C, H, latent_dim,
        force_streamed=True, d_block_override=384)
    jax.block_until_ready((out2, mean2, logvar2))
    assert float(jnp.max(jnp.abs(out2 - ref_out))) < 5e-2
    assert float(jnp.max(jnp.abs(mean2 - ref_mean))) < 5e-2
    assert float(jnp.max(jnp.abs(logvar2 - ref_logvar))) < 5e-2

    print("KERNEL_OK")
</pallas_src>

<mosaic_0001>
module attributes {stable_mosaic.version = 11 : i64} {
  func.func @_fused_kernel(%arg0: memref<2x1024xbf16, #tpu.memory_space<vmem>>, %arg1: memref<2x128xf32, #tpu.memory_space<vmem>>, %arg2: memref<1024x256xbf16, #tpu.memory_space<vmem>>, %arg3: memref<1x256xf32, #tpu.memory_space<vmem>>, %arg4: memref<256x64xbf16, #tpu.memory_space<vmem>>, %arg5: memref<1x64xf32, #tpu.memory_space<vmem>>, %arg6: memref<64x256xbf16, #tpu.memory_space<vmem>>, %arg7: memref<1x256xf32, #tpu.memory_space<vmem>>, %arg8: memref<128x64xbf16, #tpu.memory_space<vmem>>, %arg9: memref<1x64xf32, #tpu.memory_space<vmem>>, %arg10: memref<64x256xbf16, #tpu.memory_space<vmem>>, %arg11: memref<1x256xf32, #tpu.memory_space<vmem>>, %arg12: memref<256x1024xbf16, #tpu.memory_space<vmem>>, %arg13: memref<1x1024xf32, #tpu.memory_space<vmem>>, %arg14: memref<2x1024xf32, #tpu.memory_space<vmem>>, %arg15: memref<2x256xf32, #tpu.memory_space<vmem>>) attributes {dimension_semantics = [], scalar_prefetch = 0 : i64, scratch_operands = 0 : i64, tpu.core_type = #tpu.core_type<tc>} {
    %c0 = arith.constant 0 : index
    %c0_0 = arith.constant 0 : index
    %0 = vector.load %arg0[%c0, %c0_0] : memref<2x1024xbf16, #tpu.memory_space<vmem>>, vector<2x1024xbf16>
    %c0_1 = arith.constant 0 : index
    %c0_2 = arith.constant 0 : index
    %1 = vector.load %arg2[%c0_1, %c0_2] : memref<1024x256xbf16, #tpu.memory_space<vmem>>, vector<1024x256xbf16>
    %cst = arith.constant dense<0.000000e+00> : vector<2x256xf32>
    %2 = tpu.matmul %0, %1, %cst {dimension_numbers = #tpu.dot_dimension_numbers<[1], [0], [0], [1], [0, 0, 1, 1], [], []>} : vector<2x1024xbf16>, vector<1024x256xbf16>, vector<2x256xf32> -> vector<2x256xf32>
    %c0_3 = arith.constant 0 : index
    %c0_4 = arith.constant 0 : index
    %3 = vector.load %arg3[%c0_3, %c0_4] : memref<1x256xf32, #tpu.memory_space<vmem>>, vector<1x256xf32>
    %4 = vector.broadcast %3 : vector<1x256xf32> to vector<2x256xf32>
    %5 = arith.addf %2, %4 : vector<2x256xf32>
    %cst_5 = arith.constant 0.000000e+00 : f32
    %6 = vector.broadcast %cst_5 : f32 to vector<2x256xf32>
    %7 = arith.cmpf ogt, %5, %6 : vector<2x256xf32>
    %cst_6 = arith.constant 0.00999999977 : f32
    %8 = vector.broadcast %cst_6 : f32 to vector<2x256xf32>
    %9 = arith.mulf %8, %5 : vector<2x256xf32>
    %10 = arith.select %7, %5, %9 : vector<2x256xi1>, vector<2x256xf32>
    %c0_7 = arith.constant 0 : index
    %c0_8 = arith.constant 0 : index
    %11 = vector.load %arg1[%c0_7, %c0_8] : memref<2x128xf32, #tpu.memory_space<vmem>>, vector<2x128xf32>
    %c0_9 = arith.constant 0 : index
    %c0_10 = arith.constant 0 : index
    %12 = vector.load %arg4[%c0_9, %c0_10] : memref<256x64xbf16, #tpu.memory_space<vmem>>, vector<256x64xbf16>
    %c0_11 = arith.constant 0 : index
    %c0_12 = arith.constant 0 : index
    %13 = vector.load %arg5[%c0_11, %c0_12] : memref<1x64xf32, #tpu.memory_space<vmem>>, vector<1x64xf32>
    %c0_13 = arith.constant 0 : index
    %c0_14 = arith.constant 0 : index
    %14 = vector.load %arg6[%c0_13, %c0_14] : memref<64x256xbf16, #tpu.memory_space<vmem>>, vector<64x256xbf16>
    %c0_15 = arith.constant 0 : index
    %c0_16 = arith.constant 0 : index
    %15 = vector.load %arg7[%c0_15, %c0_16] : memref<1x256xf32, #tpu.memory_space<vmem>>, vector<1x256xf32>
    %c0_17 = arith.constant 0 : index
    %c0_18 = arith.constant 0 : index
    %16 = vector.load %arg8[%c0_17, %c0_18] : memref<128x64xbf16, #tpu.memory_space<vmem>>, vector<128x64xbf16>
    %c0_19 = arith.constant 0 : index
    %c0_20 = arith.constant 0 : index
    %17 = vector.load %arg9[%c0_19, %c0_20] : memref<1x64xf32, #tpu.memory_space<vmem>>, vector<1x64xf32>
    %c0_21 = arith.constant 0 : index
    %c0_22 = arith.constant 0 : index
    %18 = vector.load %arg10[%c0_21, %c0_22] : memref<64x256xbf16, #tpu.memory_space<vmem>>, vector<64x256xbf16>
    %c0_23 = arith.constant 0 : index
    %c0_24 = arith.constant 0 : index
    %19 = vector.load %arg11[%c0_23, %c0_24] : memref<1x256xf32, #tpu.memory_space<vmem>>, vector<1x256xf32>
    %20 = arith.truncf %10 : vector<2x256xf32> to vector<2x256xbf16>
    %cst_25 = arith.constant dense<0.000000e+00> : vector<2x64xf32>
    %21 = tpu.matmul %20, %12, %cst_25 {dimension_numbers = #tpu.dot_dimension_numbers<[1], [0], [0], [1], [0, 0, 1, 1], [], []>} : vector<2x256xbf16>, vector<256x64xbf16>, vector<2x64xf32> -> vector<2x64xf32>
    %22 = vector.broadcast %13 : vector<1x64xf32> to vector<2x64xf32>
    %23 = arith.addf %21, %22 : vector<2x64xf32>
    %cst_26 = arith.constant 0.000000e+00 : f32
    %24 = vector.broadcast %cst_26 : f32 to vector<2x64xf32>
    %25 = arith.cmpf ogt, %23, %24 : vector<2x64xf32>
    %cst_27 = arith.constant 0.00999999977 : f32
    %26 = vector.broadcast %cst_27 : f32 to vector<2x64xf32>
    %27 = arith.mulf %26, %23 : vector<2x64xf32>
    %28 = arith.select %25, %23, %27 : vector<2x64xi1>, vector<2x64xf32>
    %29 = arith.truncf %28 : vector<2x64xf32> to vector<2x64xbf16>
    %cst_28 = arith.constant dense<0.000000e+00> : vector<2x256xf32>
    %30 = tpu.matmul %29, %14, %cst_28 {dimension_numbers = #tpu.dot_dimension_numbers<[1], [0], [0], [1], [0, 0, 1, 1], [], []>} : vector<2x64xbf16>, vector<64x256xbf16>, vector<2x256xf32> -> vector<2x256xf32>
    %31 = vector.broadcast %15 : vector<1x256xf32> to vector<2x256xf32>
    %32 = arith.addf %30, %31 : vector<2x256xf32>
    %33 = tpu.iota {dimensions = array<i32: 1>} : vector<2x256xi32>
    %c128_i32 = arith.constant 128 : i32
    %34 = vector.broadcast %c128_i32 : i32 to vector<2x256xi32>
    %35 = arith.cmpi sge, %33, %34 : vector<2x256xi32>
    %cst_29 = arith.constant -2.000000e+01 : f32
    %cst_30 = arith.constant 2.000000e+00 : f32
    %36 = vector.broadcast %cst_29 : f32 to vector<2x256xf32>
    %37 = arith.maximumf %36, %32 : vector<2x256xf32>
    %38 = vector.broadcast %cst_30 : f32 to vector<2x256xf32>
    %39 = arith.minimumf %38, %37 : vector<2x256xf32>
    %40 = arith.select %35, %39, %32 : vector<2x256xi1>, vector<2x256xf32>
    %41 = vector.extract_strided_slice %40 {offsets = [0, 0], sizes = [2, 128], strides = [1, 1]} : vector<2x256xf32> to vector<2x128xf32>
    %42 = vector.extract_strided_slice %40 {offsets = [0, 128], sizes = [2, 128], strides = [1, 1]} : vector<2x256xf32> to vector<2x128xf32>
    %cst_31 = arith.constant 5.000000e-01 : f32
    %43 = vector.broadcast %cst_31 : f32 to vector<2x128xf32>
    %44 = arith.mulf %43, %42 : vector<2x128xf32>
    %45 = math.exp %44 : vector<2x128xf32>
    %46 = arith.mulf %11, %45 : vector<2x128xf32>
    %47 = arith.addf %46, %41 : vector<2x128xf32>
    %48 = arith.truncf %47 : vector<2x128xf32> to vector<2x128xbf16>
    %cst_32 = arith.constant dense<0.000000e+00> : vector<2x64xf32>
    %49 = tpu.matmul %48, %16, %cst_32 {dimension_numbers = #tpu.dot_dimension_numbers<[1], [0], [0], [1], [0, 0, 1, 1], [], []>} : vector<2x128xbf16>, vector<128x64xbf16>, vector<2x64xf32> -> vector<2x64xf32>
    %50 = vector.broadcast %17 : vector<1x64xf32> to vector<2x64xf32>
    %51 = arith.addf %49, %50 : vector<2x64xf32>
    %cst_33 = arith.constant 0.000000e+00 : f32
    %52 = vector.broadcast %cst_33 : f32 to vector<2x64xf32>
    %53 = arith.cmpf ogt, %51, %52 : vector<2x64xf32>
    %cst_34 = arith.constant 0.00999999977 : f32
    %54 = vector.broadcast %cst_34 : f32 to vector<2x64xf32>
    %55 = arith.mulf %54, %51 : vector<2x64xf32>
    %56 = arith.select %53, %51, %55 : vector<2x64xi1>, vector<2x64xf32>
    %57 = arith.truncf %56 : vector<2x64xf32> to vector<2x64xbf16>
    %cst_35 = arith.constant dense<0.000000e+00> : vector<2x256xf32>
    %58 = tpu.matmul %57, %18, %cst_35 {dimension_numbers = #tpu.dot_dimension_numbers<[1], [0], [0], [1], [0, 0, 1, 1], [], []>} : vector<2x64xbf16>, vector<64x256xbf16>, vector<2x256xf32> -> vector<2x256xf32>
    %59 = vector.broadcast %19 : vector<1x256xf32> to vector<2x256xf32>
    %60 = arith.addf %58, %59 : vector<2x256xf32>
    %cst_36 = arith.constant 0.000000e+00 : f32
    %61 = vector.broadcast %cst_36 : f32 to vector<2x256xf32>
    %62 = arith.cmpf ogt, %60, %61 : vector<2x256xf32>
    %cst_37 = arith.constant 0.00999999977 : f32
    %63 = vector.broadcast %cst_37 : f32 to vector<2x256xf32>
    %64 = arith.mulf %63, %60 : vector<2x256xf32>
    %65 = arith.select %62, %60, %64 : vector<2x256xi1>, vector<2x256xf32>
    %c0_38 = arith.constant 0 : index
    %c0_39 = arith.constant 0 : index
    %66 = vector.load %arg15[%c0_38, %c0_39] : memref<2x256xf32, #tpu.memory_space<vmem>>, vector<2x256xf32>
    tpu.vector_store %arg15[%c0_38, %c0_39], %40 {strides = array<i32>} : memref<2x256xf32, #tpu.memory_space<vmem>>, vector<2x256xf32>,
    %67 = arith.truncf %65 : vector<2x256xf32> to vector<2x256xbf16>
    %c0_40 = arith.constant 0 : index
    %c0_41 = arith.constant 0 : index
    %68 = vector.load %arg12[%c0_40, %c0_41] : memref<256x1024xbf16, #tpu.memory_space<vmem>>, vector<256x1024xbf16>
    %cst_42 = arith.constant dense<0.000000e+00> : vector<2x1024xf32>
    %69 = tpu.matmul %67, %68, %cst_42 {dimension_numbers = #tpu.dot_dimension_numbers<[1], [0], [0], [1], [0, 0, 1, 1], [], []>} : vector<2x256xbf16>, vector<256x1024xbf16>, vector<2x1024xf32> -> vector<2x1024xf32>
    %c0_43 = arith.constant 0 : index
    %c0_44 = arith.constant 0 : index
    %70 = vector.load %arg13[%c0_43, %c0_44] : memref<1x1024xf32, #tpu.memory_space<vmem>>, vector<1x1024xf32>
    %71 = vector.broadcast %70 : vector<1x1024xf32> to vector<2x1024xf32>
    %72 = arith.addf %69, %71 : vector<2x1024xf32>
    %c0_45 = arith.constant 0 : index
    %c0_46 = arith.constant 0 : index
    %73 = vector.load %arg14[%c0_45, %c0_46] : memref<2x1024xf32, #tpu.memory_space<vmem>>, vector<2x1024xf32>
    tpu.vector_store %arg14[%c0_45, %c0_46], %72 {strides = array<i32>} : memref<2x1024xf32, #tpu.memory_space<vmem>>, vector<2x1024xf32>,
    return
  }
}

</mosaic_0001>

<llo_original>
// kernel: tpu_custom_call.1
$region0: #{tpu_custom_call.1}
  #allocation0 [shape = 'u32[]', space=smem, size = 0x4, offset = 0x4, fixed_abs, tag = 'smem constant byte address 0x4 - core index']
  #allocation1 [shape = 'u32[144,128]{1,0:T(1,128)}', space=vmem, size = 0x12000, scoped, tag = 'internal scratch']
  %s0 = inlined_call_operand.vmem [shape: bf16[2,1024], index: 0, kind: input, shape index: {}]
  %s1 = inlined_call_operand.vmem [shape: f32[2,128], index: 1, kind: input, shape index: {}]
  %s2 = inlined_call_operand.hbm [shape: bf16[1024,256], index: 2, kind: input, shape index: {}]
  %s3 = inlined_call_operand.vmem [shape: f32[1,256], index: 3, kind: input, shape index: {}]
  %s4 = inlined_call_operand.vmem [shape: bf16[256,64], index: 4, kind: input, shape index: {}]
  %s5 = inlined_call_operand.vmem [shape: f32[1,64], index: 5, kind: input, shape index: {}]
  %s6 = inlined_call_operand.vmem [shape: bf16[64,256], index: 6, kind: input, shape index: {}]
  %s7 = inlined_call_operand.vmem [shape: f32[1,256], index: 7, kind: input, shape index: {}]
  %s8 = inlined_call_operand.vmem [shape: bf16[128,64], index: 8, kind: input, shape index: {}]
  %s9 = inlined_call_operand.vmem [shape: f32[1,64], index: 9, kind: input, shape index: {}]
  %s10 = inlined_call_operand.vmem [shape: bf16[64,256], index: 10, kind: input, shape index: {}]
  %s11 = inlined_call_operand.vmem [shape: f32[1,256], index: 11, kind: input, shape index: {}]
  %s12 = inlined_call_operand.hbm [shape: bf16[256,1024], index: 12, kind: input, shape index: {}]
  %s13 = inlined_call_operand.vmem [shape: f32[1,1024], index: 13, kind: input, shape index: {}]
  %s14 = inlined_call_operand.hbm [shape: f32[2,1024], index: 14, kind: output, shape index: {0}]
  %s15 = inlined_call_operand.hbm [shape: f32[2,256], index: 15, kind: output, shape index: {1}]
  %16 = xla_tuple %s14, %s15
  %s17 = sld [smem:[#allocation0]]
  $region82: #{tpu_custom_call.1} parent=0
    _
  %s19 = ssub.s32 1, %s17
  %s20 = scalar_select 0, %s19, %s17
  $region1: #{tpu_custom_call.1} parent=0
    #allocation2 [shape = 'u8[524288]{0}', space=vmem, size = 0x80000, scoped, tag = 'input window, operand 2, single buffered']
    #allocation3 [shape = 's32[1]{0}', space=sflag, size = 0x4, scoped, tag = 'scoped memory for tpu_custom_call.1']
    #allocation4 [shape = 's32[1]{0}', space=sflag, size = 0x4, scoped, tag = 'scoped memory for tpu_custom_call.1']
    #allocation5 [shape = 'u8[524288]{0}', space=vmem, size = 0x80000, scoped, tag = 'input window, operand 12, single buffered']
    #allocation6 [shape = 's32[1]{0}', space=sflag, size = 0x4, scoped, tag = 'scoped memory for tpu_custom_call.1']
    #allocation7 [shape = 'u8[8192]{0}', space=vmem, size = 0x2000, scoped, tag = 'output window, operand 0, single buffered']
    #allocation8 [shape = 'u8[2048]{0}', space=vmem, size = 0x800, scoped, tag = 'output window, operand 1, single buffered']
    #allocation9 [shape = 's32[1]{0}', space=sflag, size = 0x4, scoped, tag = 'scoped memory for tpu_custom_call.1']
    %21 = vsyncpa [#allocation3], 0
    %22 = vsyncpa [#allocation6], 0
    %23 = vsyncpa [#allocation4], 0
    %24 = vsyncpa [#allocation9], 0
    // Predicated region
    $region2: #{tpu_custom_call.1} parent=1 // pred_check
      _
    $region3: #{tpu_custom_call.1} parent=1 // pred_check_branch
      %26 = sbr.rel (0) target = $region5
    $region4: #{tpu_custom_call.1} parent=1 // pred_region
      _
    $region5: #{tpu_custom_call.1} parent=1 // pred_fallthru
      _
    // Predicated region
    $region6: #{tpu_custom_call.1} parent=1 // pred_check
      _
    $region7: #{tpu_custom_call.1} parent=1 // pred_check_branch
      %28 = sbr.rel (0) target = $region9
    $region8: #{tpu_custom_call.1} parent=1 // pred_region
      _
    $region9: #{tpu_custom_call.1} parent=1 // pred_fallthru
      _
    // Predicated region
    $region10: #{tpu_custom_call.1} parent=1 // pred_check
      _
    $region11: #{tpu_custom_call.1} parent=1 // pred_check_branch
      %30 = sbr.rel (0) target = $region13
    $region12: #{tpu_custom_call.1} parent=1 // pred_region
      %s32 = ssub.s32 16384, 16384
      %33 = vsyncadd [#allocation3], %s32
      %s34 = sshll.u32 [#allocation2], 4
      %s35 = int_to_ptr.vmem [resolvable:$true] %s34
      %40 = dma.hbm_to_vmem [thread:$0]  %s2, 16384, %s35, [#allocation3], 128, 128, 8
    $region13: #{tpu_custom_call.1} parent=1 // pred_fallthru
      _
    // Predicated region
    $region14: #{tpu_custom_call.1} parent=1 // pred_check
      _
    $region15: #{tpu_custom_call.1} parent=1 // pred_check_branch
      %42 = sbr.rel (0) target = $region17
    $region16: #{tpu_custom_call.1} parent=1 // pred_region
      _
    $region17: #{tpu_custom_call.1} parent=1 // pred_fallthru
      _
    // Predicated region
    $region18: #{tpu_custom_call.1} parent=1 // pred_check
      _
    $region19: #{tpu_custom_call.1} parent=1 // pred_check_branch
      %44 = sbr.rel (0) target = $region21
    $region20: #{tpu_custom_call.1} parent=1 // pred_region
      _
    $region21: #{tpu_custom_call.1} parent=1 // pred_fallthru
      _
    // Predicated region
    $region22: #{tpu_custom_call.1} parent=1 // pred_check
      _
    $region23: #{tpu_custom_call.1} parent=1 // pred_check_branch
      %46 = sbr.rel (0) target = $region25
    $region24: #{tpu_custom_call.1} parent=1 // pred_region
      _
    $region25: #{tpu_custom_call.1} parent=1 // pred_fallthru
      _
    // Predicated region
    $region26: #{tpu_custom_call.1} parent=1 // pred_check
      _
    $region27: #{tpu_custom_call.1} parent=1 // pred_check_branch
      %48 = sbr.rel (0) target = $region29
    $region28: #{tpu_custom_call.1} parent=1 // pred_region
      _
    $region29: #{tpu_custom_call.1} parent=1 // pred_fallthru
      _
    // Predicated region
    $region30: #{tpu_custom_call.1} parent=1 // pred_check
      _
    $region31: #{tpu_custom_call.1} parent=1 // pred_check_branch
      %50 = sbr.rel (0) target = $region33
    $region32: #{tpu_custom_call.1} parent=1 // pred_region
      _
    $region33: #{tpu_custom_call.1} parent=1 // pred_fallthru
      _
    // Predicated region
    $region34: #{tpu_custom_call.1} parent=1 // pred_check
      _
    $region35: #{tpu_custom_call.1} parent=1 // pred_check_branch
      %52 = sbr.rel (0) target = $region37
    $region36: #{tpu_custom_call.1} parent=1 // pred_region
      _
    $region37: #{tpu_custom_call.1} parent=1 // pred_fallthru
      _
    // Predicated region
    $region38: #{tpu_custom_call.1} parent=1 // pred_check
      _
    $region39: #{tpu_custom_call.1} parent=1 // pred_check_branch
      %54 = sbr.rel (0) target = $region41
    $region40: #{tpu_custom_call.1} parent=1 // pred_region
      _
    $region41: #{tpu_custom_call.1} parent=1 // pred_fallthru
      _
    // Predicated region
    $region42: #{tpu_custom_call.1} parent=1 // pred_check
      _
    $region43: #{tpu_custom_call.1} parent=1 // pred_check_branch
      %56 = sbr.rel (0) target = $region45
    $region44: #{tpu_custom_call.1} parent=1 // pred_region
      _
    $region45: #{tpu_custom_call.1} parent=1 // pred_fallthru
      _
    // Predicated region
    $region46: #{tpu_custom_call.1} parent=1 // pred_check
      _
    $region47: #{tpu_custom_call.1} parent=1 // pred_check_branch
      %58 = sbr.rel (0) target = $region49
    $region48: #{tpu_custom_call.1} parent=1 // pred_region
      _
    $region49: #{tpu_custom_call.1} parent=1 // pred_fallthru
      _
    // Predicated region
    $region50: #{tpu_custom_call.1} parent=1 // pred_check
      _
    $region51: #{tpu_custom_call.1} parent=1 // pred_check_branch
      %60 = sbr.rel (0) target = $region53
    $region52: #{tpu_custom_call.1} parent=1 // pred_region
      %s62 = ssub.s32 16384, 16384
      %63 = vsyncadd [#allocation6], %s62
      %s64 = sshll.u32 [#allocation5], 4
      %s65 = int_to_ptr.vmem [resolvable:$true] %s64
      %70 = dma.hbm_to_vmem [thread:$0]  %s12, 16384, %s65, [#allocation6], 512, 512, 32
    $region53: #{tpu_custom_call.1} parent=1 // pred_fallthru
      _
    // Predicated region
    $region54: #{tpu_custom_call.1} parent=1 // pred_check
      _
    $region55: #{tpu_custom_call.1} parent=1 // pred_check_branch
      %72 = sbr.rel (0) target = $region57
    $region56: #{tpu_custom_call.1} parent=1 // pred_region
      _
    $region57: #{tpu_custom_call.1} parent=1 // pred_fallthru
      _
    // Predicated region
    $region58: #{tpu_custom_call.1} parent=1 // pred_check
      _
    $region59: #{tpu_custom_call.1} parent=1 // pred_check_branch
      %74 = sbr.rel (0) target = $region61
    $region60: #{tpu_custom_call.1} parent=1 // pred_region
      %75 = dma.done [#allocation3], 16384
    $region61: #{tpu_custom_call.1} parent=1 // pred_fallthru
      _
    // Predicated region
    $region62: #{tpu_custom_call.1} parent=1 // pred_check
      _
    $region63: #{tpu_custom_call.1} parent=1 // pred_check_branch
      %77 = sbr.rel (0) target = $region65
    $region64: #{tpu_custom_call.1} parent=1 // pred_region
      %78 = dma.done [#allocation6], 16384
    $region65: #{tpu_custom_call.1} parent=1 // pred_fallthru
      _
    %v80 = vld [vmem:[%s0] sm:$0xff]
    %v81 = vld [vmem:[#allocation2] sm:$0xff]
    %v82 = vld [vmem:[#allocation2 + $0x8] sm:$0xff]
    %v83 = vld [vmem:[#allocation2 + $0x10] sm:$0xff]
    %v84 = vld [vmem:[#allocation2 + $0x18] sm:$0xff]
    %v85 = vld [vmem:[#allocation2 + $0x20] sm:$0xff]
    %v86 = vld [vmem:[#allocation2 + $0x28] sm:$0xff]
    %v87 = vld [vmem:[#allocation2 + $0x30] sm:$0xff]
    %v88 = vld [vmem:[#allocation2 + $0x38] sm:$0xff]
    %v89 = vld [vmem:[#allocation2 + $0x40] sm:$0xff]
    %v90 = vld [vmem:[#allocation2 + $0x48] sm:$0xff]
    %v91 = vld [vmem:[#allocation2 + $0x50] sm:$0xff]
    %v92 = vld [vmem:[#allocation2 + $0x58] sm:$0xff]
    %v93 = vld [vmem:[#allocation2 + $0x60] sm:$0xff]
    %v94 = vld [vmem:[#allocation2 + $0x68] sm:$0xff]
    %v95 = vld [vmem:[#allocation2 + $0x70] sm:$0xff]
    %v96 = vld [vmem:[#allocation2 + $0x78] sm:$0xff]
    %v97 = vld [vmem:[#allocation2 + $0x80] sm:$0xff]
    %v98 = vld [vmem:[#allocation2 + $0x88] sm:$0xff]
    %v99 = vld [vmem:[#allocation2 + $0x90] sm:$0xff]
    %v100 = vld [vmem:[#allocation2 + $0x98] sm:$0xff]
    %v101 = vld [vmem:[#allocation2 + $0xa0] sm:$0xff]
    %v102 = vld [vmem:[#allocation2 + $0xa8] sm:$0xff]
    %v103 = vld [vmem:[#allocation2 + $0xb0] sm:$0xff]
    %v104 = vld [vmem:[#allocation2 + $0xb8] sm:$0xff]
    %v105 = vld [vmem:[#allocation2 + $0xc0] sm:$0xff]
    %v106 = vld [vmem:[#allocation2 + $0xc8] sm:$0xff]
    %v107 = vld [vmem:[#allocation2 + $0xd0] sm:$0xff]
    %v108 = vld [vmem:[#allocation2 + $0xd8] sm:$0xff]
    %v109 = vld [vmem:[#allocation2 + $0xe0] sm:$0xff]
    %v110 = vld [vmem:[#allocation2 + $0xe8] sm:$0xff]
    %v111 = vld [vmem:[#allocation2 + $0xf0] sm:$0xff]
    %v112 = vld [vmem:[#allocation2 + $0xf8] sm:$0xff]
    %v113 = vld [vmem:[#allocation2 + $0x100] sm:$0xff]
    %v114 = vld [vmem:[#allocation2 + $0x108] sm:$0xff]
    %v115 = vld [vmem:[#allocation2 + $0x110] sm:$0xff]
    %v116 = vld [vmem:[#allocation2 + $0x118] sm:$0xff]
    %v117 = vld [vmem:[#allocation2 + $0x120] sm:$0xff]
    %v118 = vld [vmem:[#allocation2 + $0x128] sm:$0xff]
    %v119 = vld [vmem:[#allocation2 + $0x130] sm:$0xff]
    %v120 = vld [vmem:[#allocation2 + $0x138] sm:$0xff]
    %v121 = vld [vmem:[#allocation2 + $0x140] sm:$0xff]
    %v122 = vld [vmem:[#allocation2 + $0x148] sm:$0xff]
    %v123 = vld [vmem:[#allocation2 + $0x150] sm:$0xff]
    %v124 = vld [vmem:[#allocation2 + $0x158] sm:$0xff]
    %v125 = vld [vmem:[#allocation2 + $0x160] sm:$0xff]
    %v126 = vld [vmem:[#allocation2 + $0x168] sm:$0xff]
    %v127 = vld [vmem:[#allocation2 + $0x170] sm:$0xff]
    %v128 = vld [vmem:[#allocation2 + $0x178] sm:$0xff]
    %v129 = vld [vmem:[#allocation2 + $0x180] sm:$0xff]
    %v130 = vld [vmem:[#allocation2 + $0x188] sm:$0xff]
    %v131 = vld [vmem:[#allocation2 + $0x190] sm:$0xff]
    %v132 = vld [vmem:[#allocation2 + $0x198] sm:$0xff]
    %v133 = vld [vmem:[#allocation2 + $0x1a0] sm:$0xff]
    %v134 = vld [vmem:[#allocation2 + $0x1a8] sm:$0xff]
    %v135 = vld [vmem:[#allocation2 + $0x1b0] sm:$0xff]
    %v136 = vld [vmem:[#allocation2 + $0x1b8] sm:$0xff]
    %v137 = vld [vmem:[#allocation2 + $0x1c0] sm:$0xff]
    %v138 = vld [vmem:[#allocation2 + $0x1c8] sm:$0xff]
    %v139 = vld [vmem:[#allocation2 + $0x1d0] sm:$0xff]
    %v140 = vld [vmem:[#allocation2 + $0x1d8] sm:$0xff]
    %v141 = vld [vmem:[#allocation2 + $0x1e0] sm:$0xff]
    %v142 = vld [vmem:[#allocation2 + $0x1e8] sm:$0xff]
    %v143 = vld [vmem:[#allocation2 + $0x1f0] sm:$0xff]
    %v144 = vld [vmem:[#allocation2 + $0x1f8] sm:$0xff]
    %v145 = vld [vmem:[#allocation2 + $0x200] sm:$0xff]
    %v146 = vld [vmem:[#allocation2 + $0x208] sm:$0xff]
    %v147 = vld [vmem:[#allocation2 + $0x210] sm:$0xff]
    %v148 = vld [vmem:[#allocation2 + $0x218] sm:$0xff]
    %v149 = vld [vmem:[#allocation2 + $0x220] sm:$0xff]
    %v150 = vld [vmem:[#allocation2 + $0x228] sm:$0xff]
    %v151 = vld [vmem:[#allocation2 + $0x230] sm:$0xff]
    %v152 = vld [vmem:[#allocation2 + $0x238] sm:$0xff]
    %v153 = vld [vmem:[#allocation2 + $0x240] sm:$0xff]
    %v154 = vld [vmem:[#allocation2 + $0x248] sm:$0xff]
    %v155 = vld [vmem:[#allocation2 + $0x250] sm:$0xff]
    %v156 = vld [vmem:[#allocation2 + $0x258] sm:$0xff]
    %v157 = vld [vmem:[#allocation2 + $0x260] sm:$0xff]
    %v158 = vld [vmem:[#allocation2 + $0x268] sm:$0xff]
    %v159 = vld [vmem:[#allocation2 + $0x270] sm:$0xff]
    %v160 = vld [vmem:[#allocation2 + $0x278] sm:$0xff]
    %v161 = vld [vmem:[#allocation2 + $0x280] sm:$0xff]
    %v162 = vld [vmem:[#allocation2 + $0x288] sm:$0xff]
    %v163 = vld [vmem:[#allocation2 + $0x290] sm:$0xff]
    %v164 = vld [vmem:[#allocation2 + $0x298] sm:$0xff]
    %v165 = vld [vmem:[#allocation2 + $0x2a0] sm:$0xff]
    %v166 = vld [vmem:[#allocation2 + $0x2a8] sm:$0xff]
    %v167 = vld [vmem:[#allocation2 + $0x2b0] sm:$0xff]
    %v168 = vld [vmem:[#allocation2 + $0x2b8] sm:$0xff]
    %v169 = vld [vmem:[#allocation2 + $0x2c0] sm:$0xff]
    %v170 = vld [vmem:[#allocation2 + $0x2c8] sm:$0xff]
    %v171 = vld [vmem:[#allocation2 + $0x2d0] sm:$0xff]
    %v172 = vld [vmem:[#allocation2 + $0x2d8] sm:$0xff]
    %v173 = vld [vmem:[#allocation2 + $0x2e0] sm:$0xff]
    %v174 = vld [vmem:[#allocation2 + $0x2e8] sm:$0xff]
    %v175 = vld [vmem:[#allocation2 + $0x2f0] sm:$0xff]
    %v176 = vld [vmem:[#allocation2 + $0x2f8] sm:$0xff]
    %v177 = vld [vmem:[#allocation2 + $0x300] sm:$0xff]
    %v178 = vld [vmem:[#allocation2 + $0x308] sm:$0xff]
    %v179 = vld [vmem:[#allocation2 + $0x310] sm:$0xff]
    %v180 = vld [vmem:[#allocation2 + $0x318] sm:$0xff]
    %v181 = vld [vmem:[#allocation2 + $0x320] sm:$0xff]
    %v182 = vld [vmem:[#allocation2 + $0x328] sm:$0xff]
    %v183 = vld [vmem:[#allocation2 + $0x330] sm:$0xff]
    %v184 = vld [vmem:[#allocation2 + $0x338] sm:$0xff]
    %v185 = vld [vmem:[#allocation2 + $0x340] sm:$0xff]
    %v186 = vld [vmem:[#allocation2 + $0x348] sm:$0xff]
    %v187 = vld [vmem:[#allocation2 + $0x350] sm:$0xff]
    %v188 = vld [vmem:[#allocation2 + $0x358] sm:$0xff]
    %v189 = vld [vmem:[#allocation2 + $0x360] sm:$0xff]
    %v190 = vld [vmem:[#allocation2 + $0x368] sm:$0xff]
    %v191 = vld [vmem:[#allocation2 + $0x370] sm:$0xff]
    %v192 = vld [vmem:[#allocation2 + $0x378] sm:$0xff]
    %v193 = vld [vmem:[#allocation2 + $0x380] sm:$0xff]
    %v194 = vld [vmem:[#allocation2 + $0x388] sm:$0xff]
    %v195 = vld [vmem:[#allocation2 + $0x390] sm:$0xff]
    %v196 = vld [vmem:[#allocation2 + $0x398] sm:$0xff]
    %v197 = vld [vmem:[#allocation2 + $0x3a0] sm:$0xff]
    %v198 = vld [vmem:[#allocation2 + $0x3a8] sm:$0xff]
    %v199 = vld [vmem:[#allocation2 + $0x3b0] sm:$0xff]
    %v200 = vld [vmem:[#allocation2 + $0x3b8] sm:$0xff]
    %v201 = vld [vmem:[#allocation2 + $0x3c0] sm:$0xff]
    %v202 = vld [vmem:[#allocation2 + $0x3c8] sm:$0xff]
    %v203 = vld [vmem:[#allocation2 + $0x3d0] sm:$0xff]
    %v204 = vld [vmem:[#allocation2 + $0x3d8] sm:$0xff]
    %v205 = vld [vmem:[#allocation2 + $0x3e0] sm:$0xff]
    %v206 = vld [vmem:[#allocation2 + $0x3e8] sm:$0xff]
    %v207 = vld [vmem:[#allocation2 + $0x3f0] sm:$0xff]
    %v208 = vld [vmem:[#allocation2 + $0x3f8] sm:$0xff]
    %v209 = vld [vmem:[%s3] sm:$0x3]
    %v211 = vlaneseq
    %v212 = vshrl.u32 %v211, 7
    %v213 = vsub.s32 0, %v212
    %v214 = vrot.slane %v209, %v213
    %v215 = vlaneseq
    %v216 = vshrl.u32 %v215, 7
    %v217 = vsub.s32 1, %v216
    %v218 = vrot.slane %v209, %v217
    %v222 = vcombine.high %v80, %v80
    %v224 = vunpack.c.l.s4 1966171168
    %v225 = vunpack.c.0.s8 %v224
    %v226 = vlaneseq
    %v227 = vshrl.u32 %v226, 7
    %v228 = vsub.s32 %v225, %v227
    %v229 = vrot.slane %v80, %v228
    %v231 = vunpack.c.l.s4 1966171168
    %v232 = vunpack.c.0.s8 %v231
    %v233 = vlaneseq
    %v234 = vshrl.u32 %v233, 7
    %v235 = vsub.s32 %v232, %v234
    %v236 = vrot.slane %v222, %v235
    %v237 = vcombine.high %v229, %v229
    %v238 = vcombine.high %v236, %v236
    %v240 = vunpack.c.l.s4 1966171168
    %v241 = vunpack.c.0.s8 %v240
    %v242 = vlaneseq
    %v243 = vshrl.u32 %v242, 7
    %v244 = vsub.s32 %v241, %v243
    %v245 = vrot.slane %v229, %v244
    %v247 = vunpack.c.l.s4 1966171168
    %v248 = vunpack.c.0.s8 %v247
    %v249 = vlaneseq
    %v250 = vshrl.u32 %v249, 7
    %v251 = vsub.s32 %v248, %v250
    %v252 = vrot.slane %v236, %v251
    %v254 = vunpack.c.l.s4 1966171168
    %v255 = vunpack.c.0.s8 %v254
    %v256 = vlaneseq
    %v257 = vshrl.u32 %v256, 7
    %v258 = vsub.s32 %v255, %v257
    %v259 = vrot.slane %v237, %v258
    %v261 = vunpack.c.l.s4 1966171168
    %v262 = vunpack.c.0.s8 %v261
    %v263 = vlaneseq
    %v264 = vshrl.u32 %v263, 7
    %v265 = vsub.s32 %v262, %v264
    %v266 = vrot.slane %v238, %v265
    %v267 = vcombine.high %v245, %v245
    %v268 = vcombine.high %v252, %v252
    %v269 = vcombine.high %v259, %v259
    %v270 = vcombine.high %v266, %v266
    %v407 = vunpack.c.l.b16 %v81
    %v408 = vunpack.c.h.b16 %v81
    %v409 = vunpack.c.l.b16 %v82
    %v410 = vunpack.c.h.b16 %v82
    %v411 = vunpack.c.l.b16 %v83
    %v412 = vunpack.c.h.b16 %v83
    %v413 = vunpack.c.l.b16 %v84
    %v414 = vunpack.c.h.b16 %v84
    %v415 = vunpack.c.l.b16 %v85
    %v416 = vunpack.c.h.b16 %v85
    %v417 = vunpack.c.l.b16 %v86
    %v418 = vunpack.c.h.b16 %v86
    %v419 = vunpack.c.l.b16 %v87
    %v420 = vunpack.c.h.b16 %v87
    %v421 = vunpack.c.l.b16 %v88
    %v422 = vunpack.c.h.b16 %v88
    %v423 = vunpack.c.l.b16 %v89
    %v424 = vunpack.c.h.b16 %v89
    %v425 = vunpack.c.l.b16 %v90
    %v426 = vunpack.c.h.b16 %v90
    %v427 = vunpack.c.l.b16 %v91
    %v428 = vunpack.c.h.b16 %v91
    %v429 = vunpack.c.l.b16 %v92
    %v430 = vunpack.c.h.b16 %v92
    %v431 = vunpack.c.l.b16 %v93
    %v432 = vunpack.c.h.b16 %v93
    %v433 = vunpack.c.l.b16 %v94
    %v434 = vunpack.c.h.b16 %v94
    %v435 = vunpack.c.l.b16 %v95
    %v436 = vunpack.c.h.b16 %v95
    %v437 = vunpack.c.l.b16 %v96
    %v438 = vunpack.c.h.b16 %v96
    %v439 = vunpack.c.l.b16 %v97
    %v440 = vunpack.c.h.b16 %v97
    %v441 = vunpack.c.l.b16 %v98
    %v442 = vunpack.c.h.b16 %v98
    %v443 = vunpack.c.l.b16 %v99
    %v444 = vunpack.c.h.b16 %v99
    %v445 = vunpack.c.l.b16 %v100
    %v446 = vunpack.c.h.b16 %v100
    %v447 = vunpack.c.l.b16 %v101
    %v448 = vunpack.c.h.b16 %v101
    %v449 = vunpack.c.l.b16 %v102
    %v450 = vunpack.c.h.b16 %v102
    %v451 = vunpack.c.l.b16 %v103
    %v452 = vunpack.c.h.b16 %v103
    %v453 = vunpack.c.l.b16 %v104
    %v454 = vunpack.c.h.b16 %v104
    %v455 = vunpack.c.l.b16 %v105
    %v456 = vunpack.c.h.b16 %v105
    %v457 = vunpack.c.l.b16 %v106
    %v458 = vunpack.c.h.b16 %v106
    %v459 = vunpack.c.l.b16 %v107
    %v460 = vunpack.c.h.b16 %v107
    %v461 = vunpack.c.l.b16 %v108
    %v462 = vunpack.c.h.b16 %v108
    %v463 = vunpack.c.l.b16 %v109
    %v464 = vunpack.c.h.b16 %v109
    %v465 = vunpack.c.l.b16 %v110
    %v466 = vunpack.c.h.b16 %v110
    %v467 = vunpack.c.l.b16 %v111
    %v468 = vunpack.c.h.b16 %v111
    %v469 = vunpack.c.l.b16 %v112
    %v470 = vunpack.c.h.b16 %v112
    %v471 = vunpack.c.l.b16 %v113
    %v472 = vunpack.c.h.b16 %v113
    %v473 = vunpack.c.l.b16 %v114
    %v474 = vunpack.c.h.b16 %v114
    %v475 = vunpack.c.l.b16 %v115
    %v476 = vunpack.c.h.b16 %v115
    %v477 = vunpack.c.l.b16 %v116
    %v478 = vunpack.c.h.b16 %v116
    %v479 = vunpack.c.l.b16 %v117
    %v480 = vunpack.c.h.b16 %v117
    %v481 = vunpack.c.l.b16 %v118
    %v482 = vunpack.c.h.b16 %v118
    %v483 = vunpack.c.l.b16 %v119
    %v484 = vunpack.c.h.b16 %v119
    %v485 = vunpack.c.l.b16 %v120
    %v486 = vunpack.c.h.b16 %v120
    %v487 = vunpack.c.l.b16 %v121
    %v488 = vunpack.c.h.b16 %v121
    %v489 = vunpack.c.l.b16 %v122
    %v490 = vunpack.c.h.b16 %v122
    %v491 = vunpack.c.l.b16 %v123
    %v492 = vunpack.c.h.b16 %v123
    %v493 = vunpack.c.l.b16 %v124
    %v494 = vunpack.c.h.b16 %v124
    %v495 = vunpack.c.l.b16 %v125
    %v496 = vunpack.c.h.b16 %v125
    %v497 = vunpack.c.l.b16 %v126
    %v498 = vunpack.c.h.b16 %v126
    %v499 = vunpack.c.l.b16 %v127
    %v500 = vunpack.c.h.b16 %v127
    %v501 = vunpack.c.l.b16 %v128
    %v502 = vunpack.c.h.b16 %v128
    %v503 = vunpack.c.l.b16 %v129
    %v504 = vunpack.c.h.b16 %v129
    %v505 = vunpack.c.l.b16 %v130
    %v506 = vunpack.c.h.b16 %v130
    %v507 = vunpack.c.l.b16 %v131
    %v508 = vunpack.c.h.b16 %v131
    %v509 = vunpack.c.l.b16 %v132
    %v510 = vunpack.c.h.b16 %v132
    %v511 = vunpack.c.l.b16 %v133
    %v512 = vunpack.c.h.b16 %v133
    %v513 = vunpack.c.l.b16 %v134
    %v514 = vunpack.c.h.b16 %v134
    %v515 = vunpack.c.l.b16 %v135
    %v516 = vunpack.c.h.b16 %v135
    %v517 = vunpack.c.l.b16 %v136
    %v518 = vunpack.c.h.b16 %v136
    %v519 = vunpack.c.l.b16 %v137
    %v520 = vunpack.c.h.b16 %v137
    %v521 = vunpack.c.l.b16 %v138
    %v522 = vunpack.c.h.b16 %v138
    %v523 = vunpack.c.l.b16 %v139
    %v524 = vunpack.c.h.b16 %v139
    %v525 = vunpack.c.l.b16 %v140
    %v526 = vunpack.c.h.b16 %v140
    %v527 = vunpack.c.l.b16 %v141
    %v528 = vunpack.c.h.b16 %v141
    %v529 = vunpack.c.l.b16 %v142
    %v530 = vunpack.c.h.b16 %v142
    %v531 = vunpack.c.l.b16 %v143
    %v532 = vunpack.c.h.b16 %v143
    %v533 = vunpack.c.l.b16 %v144
    %v534 = vunpack.c.h.b16 %v144
    %v535 = vunpack.c.l.b16 %v145
    %v536 = vunpack.c.h.b16 %v145
    %v537 = vunpack.c.l.b16 %v146
    %v538 = vunpack.c.h.b16 %v146
    %v539 = vunpack.c.l.b16 %v147
    %v540 = vunpack.c.h.b16 %v147
    %v541 = vunpack.c.l.b16 %v148
    %v542 = vunpack.c.h.b16 %v148
    %v543 = vunpack.c.l.b16 %v149
    %v544 = vunpack.c.h.b16 %v149
    %v545 = vunpack.c.l.b16 %v150
    %v546 = vunpack.c.h.b16 %v150
    %v547 = vunpack.c.l.b16 %v151
    %v548 = vunpack.c.h.b16 %v151
    %v549 = vunpack.c.l.b16 %v152
    %v550 = vunpack.c.h.b16 %v152
    %v551 = vunpack.c.l.b16 %v153
    %v552 = vunpack.c.h.b16 %v153
    %v553 = vunpack.c.l.b16 %v154
    %v554 = vunpack.c.h.b16 %v154
    %v555 = vunpack.c.l.b16 %v155
    %v556 = vunpack.c.h.b16 %v155
    %v557 = vunpack.c.l.b16 %v156
    %v558 = vunpack.c.h.b16 %v156
    %v559 = vunpack.c.l.b16 %v157
    %v560 = vunpack.c.h.b16 %v157
    %v561 = vunpack.c.l.b16 %v158
    %v562 = vunpack.c.h.b16 %v158
    %v563 = vunpack.c.l.b16 %v159
    %v564 = vunpack.c.h.b16 %v159
    %v565 = vunpack.c.l.b16 %v160
    %v566 = vunpack.c.h.b16 %v160
    %v567 = vunpack.c.l.b16 %v161
    %v568 = vunpack.c.h.b16 %v161
    %v569 = vunpack.c.l.b16 %v162
    %v570 = vunpack.c.h.b16 %v162
    %v571 = vunpack.c.l.b16 %v163
    %v572 = vunpack.c.h.b16 %v163
    %v573 = vunpack.c.l.b16 %v164
    %v574 = vunpack.c.h.b16 %v164
    %v575 = vunpack.c.l.b16 %v165
    %v576 = vunpack.c.h.b16 %v165
    %v577 = vunpack.c.l.b16 %v166
    %v578 = vunpack.c.h.b16 %v166
    %v579 = vunpack.c.l.b16 %v167
    %v580 = vunpack.c.h.b16 %v167
    %v581 = vunpack.c.l.b16 %v168
    %v582 = vunpack.c.h.b16 %v168
    %v583 = vunpack.c.l.b16 %v169
    %v584 = vunpack.c.h.b16 %v169
    %v585 = vunpack.c.l.b16 %v170
    %v586 = vunpack.c.h.b16 %v170
    %v587 = vunpack.c.l.b16 %v171
    %v588 = vunpack.c.h.b16 %v171
    %v589 = vunpack.c.l.b16 %v172
    %v590 = vunpack.c.h.b16 %v172
    %v591 = vunpack.c.l.b16 %v173
    %v592 = vunpack.c.h.b16 %v173
    %v593 = vunpack.c.l.b16 %v174
    %v594 = vunpack.c.h.b16 %v174
    %v595 = vunpack.c.l.b16 %v175
    %v596 = vunpack.c.h.b16 %v175
    %v597 = vunpack.c.l.b16 %v176
    %v598 = vunpack.c.h.b16 %v176
    %v599 = vunpack.c.l.b16 %v177
    %v600 = vunpack.c.h.b16 %v177
    %v601 = vunpack.c.l.b16 %v178
    %v602 = vunpack.c.h.b16 %v178
    %v603 = vunpack.c.l.b16 %v179
    %v604 = vunpack.c.h.b16 %v179
    %v605 = vunpack.c.l.b16 %v180
    %v606 = vunpack.c.h.b16 %v180
    %v607 = vunpack.c.l.b16 %v181
    %v608 = vunpack.c.h.b16 %v181
    %v609 = vunpack.c.l.b16 %v182
    %v610 = vunpack.c.h.b16 %v182
    %v611 = vunpack.c.l.b16 %v183
    %v612 = vunpack.c.h.b16 %v183
    %v613 = vunpack.c.l.b16 %v184
    %v614 = vunpack.c.h.b16 %v184
    %v615 = vunpack.c.l.b16 %v185
    %v616 = vunpack.c.h.b16 %v185
    %v617 = vunpack.c.l.b16 %v186
    %v618 = vunpack.c.h.b16 %v186
    %v619 = vunpack.c.l.b16 %v187
    %v620 = vunpack.c.h.b16 %v187
    %v621 = vunpack.c.l.b16 %v188
    %v622 = vunpack.c.h.b16 %v188
    %v623 = vunpack.c.l.b16 %v189
    %v624 = vunpack.c.h.b16 %v189
    %v625 = vunpack.c.l.b16 %v190
    %v626 = vunpack.c.h.b16 %v190
    %v627 = vunpack.c.l.b16 %v191
    %v628 = vunpack.c.h.b16 %v191
    %v629 = vunpack.c.l.b16 %v192
    %v630 = vunpack.c.h.b16 %v192
    %v631 = vunpack.c.l.b16 %v193
    %v632 = vunpack.c.h.b16 %v193
    %v633 = vunpack.c.l.b16 %v194
    %v634 = vunpack.c.h.b16 %v194
    %v635 = vunpack.c.l.b16 %v195
    %v636 = vunpack.c.h.b16 %v195
    %v637 = vunpack.c.l.b16 %v196
    %v638 = vunpack.c.h.b16 %v196
    %v639 = vunpack.c.l.b16 %v197
    %v640 = vunpack.c.h.b16 %v197
    %v641 = vunpack.c.l.b16 %v198
    %v642 = vunpack.c.h.b16 %v198
    %v643 = vunpack.c.l.b16 %v199
    %v644 = vunpack.c.h.b16 %v199
    %v645 = vunpack.c.l.b16 %v200
    %v646 = vunpack.c.h.b16 %v200
    %v647 = vunpack.c.l.b16 %v201
    %v648 = vunpack.c.h.b16 %v201
    %v649 = vunpack.c.l.b16 %v202
    %v650 = vunpack.c.h.b16 %v202
    %v651 = vunpack.c.l.b16 %v203
    %v652 = vunpack.c.h.b16 %v203
    %v653 = vunpack.c.l.b16 %v204
    %v654 = vunpack.c.h.b16 %v204
    %v655 = vunpack.c.l.b16 %v205
    %v656 = vunpack.c.h.b16 %v205
    %v657 = vunpack.c.l.b16 %v206
    %v658 = vunpack.c.h.b16 %v206
    %v659 = vunpack.c.l.b16 %v207
    %v660 = vunpack.c.h.b16 %v207
    %v661 = vunpack.c.l.b16 %v208
    %v662 = vunpack.c.h.b16 %v208
    %v663 = vpack.c.b16 %v409, %v407
    %v664 = vpack.c.b16 %v410, %v408
    %v665 = vpack.c.b16 %v413, %v411
    %v666 = vpack.c.b16 %v414, %v412
    %v667 = vpack.c.b16 %v417, %v415
    %v668 = vpack.c.b16 %v418, %v416
    %v669 = vpack.c.b16 %v421, %v419
    %v670 = vpack.c.b16 %v422, %v420
    %v671 = vpack.c.b16 %v425, %v423
    %v672 = vpack.c.b16 %v426, %v424
    %v673 = vpack.c.b16 %v429, %v427
    %v674 = vpack.c.b16 %v430, %v428
    %v675 = vpack.c.b16 %v433, %v431
    %v676 = vpack.c.b16 %v434, %v432
    %v677 = vpack.c.b16 %v437, %v435
    %v678 = vpack.c.b16 %v438, %v436
    %v679 = vpack.c.b16 %v441, %v439
    %v680 = vpack.c.b16 %v442, %v440
    %v681 = vpack.c.b16 %v445, %v443
    %v682 = vpack.c.b16 %v446, %v444
    %v683 = vpack.c.b16 %v449, %v447
    %v684 = vpack.c.b16 %v450, %v448
    %v685 = vpack.c.b16 %v453, %v451
    %v686 = vpack.c.b16 %v454, %v452
    %v687 = vpack.c.b16 %v457, %v455
    %v688 = vpack.c.b16 %v458, %v456
    %v689 = vpack.c.b16 %v461, %v459
    %v690 = vpack.c.b16 %v462, %v460
    %v691 = vpack.c.b16 %v465, %v463
    %v692 = vpack.c.b16 %v466, %v464
    %v693 = vpack.c.b16 %v469, %v467
    %v694 = vpack.c.b16 %v470, %v468
    %v695 = vpack.c.b16 %v473, %v471
    %v696 = vpack.c.b16 %v474, %v472
    %v697 = vpack.c.b16 %v477, %v475
    %v698 = vpack.c.b16 %v478, %v476
    %v699 = vpack.c.b16 %v481, %v479
    %v700 = vpack.c.b16 %v482, %v480
    %v701 = vpack.c.b16 %v485, %v483
    %v702 = vpack.c.b16 %v486, %v484
    %v703 = vpack.c.b16 %v489, %v487
    %v704 = vpack.c.b16 %v490, %v488
    %v705 = vpack.c.b16 %v493, %v491
    %v706 = vpack.c.b16 %v494, %v492
    %v707 = vpack.c.b16 %v497, %v495
    %v708 = vpack.c.b16 %v498, %v496
    %v709 = vpack.c.b16 %v501, %v499
    %v710 = vpack.c.b16 %v502, %v500
    %v711 = vpack.c.b16 %v505, %v503
    %v712 = vpack.c.b16 %v506, %v504
    %v713 = vpack.c.b16 %v509, %v507
    %v714 = vpack.c.b16 %v510, %v508
    %v715 = vpack.c.b16 %v513, %v511
    %v716 = vpack.c.b16 %v514, %v512
    %v717 = vpack.c.b16 %v517, %v515
    %v718 = vpack.c.b16 %v518, %v516
    %v719 = vpack.c.b16 %v521, %v519
    %v720 = vpack.c.b16 %v522, %v520
    %v721 = vpack.c.b16 %v525, %v523
    %v722 = vpack.c.b16 %v526, %v524
    %v723 = vpack.c.b16 %v529, %v527
    %v724 = vpack.c.b16 %v530, %v528
    %v725 = vpack.c.b16 %v533, %v531
    %v726 = vpack.c.b16 %v534, %v532
    %v727 = vpack.c.b16 %v537, %v535
    %v728 = vpack.c.b16 %v538, %v536
    %v729 = vpack.c.b16 %v541, %v539
    %v730 = vpack.c.b16 %v542, %v540
    %v731 = vpack.c.b16 %v545, %v543
    %v732 = vpack.c.b16 %v546, %v544
    %v733 = vpack.c.b16 %v549, %v547
    %v734 = vpack.c.b16 %v550, %v548
    %v735 = vpack.c.b16 %v553, %v551
    %v736 = vpack.c.b16 %v554, %v552
    %v737 = vpack.c.b16 %v557, %v555
    %v738 = vpack.c.b16 %v558, %v556
    %v739 = vpack.c.b16 %v561, %v559
    %v740 = vpack.c.b16 %v562, %v560
    %v741 = vpack.c.b16 %v565, %v563
    %v742 = vpack.c.b16 %v566, %v564
    %v743 = vpack.c.b16 %v569, %v567
    %v744 = vpack.c.b16 %v570, %v568
    %v745 = vpack.c.b16 %v573, %v571
    %v746 = vpack.c.b16 %v574, %v572
    %v747 = vpack.c.b16 %v577, %v575
    %v748 = vpack.c.b16 %v578, %v576
    %v749 = vpack.c.b16 %v581, %v579
    %v750 = vpack.c.b16 %v582, %v580
    %v751 = vpack.c.b16 %v585, %v583
    %v752 = vpack.c.b16 %v586, %v584
    %v753 = vpack.c.b16 %v589, %v587
    %v754 = vpack.c.b16 %v590, %v588
    %v755 = vpack.c.b16 %v593, %v591
    %v756 = vpack.c.b16 %v594, %v592
    %v757 = vpack.c.b16 %v597, %v595
    %v758 = vpack.c.b16 %v598, %v596
    %v759 = vpack.c.b16 %v601, %v599
    %v760 = vpack.c.b16 %v602, %v600
    %v761 = vpack.c.b16 %v605, %v603
    %v762 = vpack.c.b16 %v606, %v604
    %v763 = vpack.c.b16 %v609, %v607
    %v764 = vpack.c.b16 %v610, %v608
    %v765 = vpack.c.b16 %v613, %v611
    %v766 = vpack.c.b16 %v614, %v612
    %v767 = vpack.c.b16 %v617, %v615
    %v768 = vpack.c.b16 %v618, %v616
    %v769 = vpack.c.b16 %v621, %v619
    %v770 = vpack.c.b16 %v622, %v620
    %v771 = vpack.c.b16 %v625, %v623
    %v772 = vpack.c.b16 %v626, %v624
    %v773 = vpack.c.b16 %v629, %v627
    %v774 = vpack.c.b16 %v630, %v628
    %v775 = vpack.c.b16 %v633, %v631
    %v776 = vpack.c.b16 %v634, %v632
    %v777 = vpack.c.b16 %v637, %v635
    %v778 = vpack.c.b16 %v638, %v636
    %v779 = vpack.c.b16 %v641, %v639
    %v780 = vpack.c.b16 %v642, %v640
    %v781 = vpack.c.b16 %v645, %v643
    %v782 = vpack.c.b16 %v646, %v644
    %v783 = vpack.c.b16 %v649, %v647
    %v784 = vpack.c.b16 %v650, %v648
    %v785 = vpack.c.b16 %v653, %v651
    %v786 = vpack.c.b16 %v654, %v652
    %v787 = vpack.c.b16 %v657, %v655
    %v788 = vpack.c.b16 %v658, %v656
    %v789 = vpack.c.b16 %v661, %v659
    %v790 = vpack.c.b16 %v662, %v660
    %919 = vmatprep.subr.bf16.mxu0 %v664
    %920 = vmatpush1.bf16.msra.mxu0 %v663
    %921 = vmatprep.subr.bf16.mxu0 %v666
    %922 = vmatpush1.bf16.msra.mxu0 %v665
    %923 = vmatprep.subr.bf16.mxu0 %v668
    %924 = vmatpush1.bf16.msra.mxu0 %v667
    %925 = vmatprep.subr.bf16.mxu0 %v670
    %926 = vmatpush1.bf16.msra.mxu0 %v669
    %927 = vmatprep.subr.bf16.mxu0 %v672
    %928 = vmatpush1.bf16.msra.mxu0 %v671
    %929 = vmatprep.subr.bf16.mxu0 %v674
    %930 = vmatpush1.bf16.msra.mxu0 %v673
    %931 = vmatprep.subr.bf16.mxu0 %v676
    %932 = vmatpush1.bf16.msra.mxu0 %v675
    %933 = vmatprep.subr.bf16.mxu0 %v678
    %934 = vmatpush1.bf16.msra.mxu0 %v677
    %935 = vmatprep.subr.bf16.mxu0 %v680
    %936 = vmatpush1.bf16.msra.mxu0 %v679
    %937 = vmatprep.subr.bf16.mxu0 %v682
    %938 = vmatpush1.bf16.msra.mxu0 %v681
    %939 = vmatprep.subr.bf16.mxu0 %v684
    %940 = vmatpush1.bf16.msra.mxu0 %v683
    %941 = vmatprep.subr.bf16.mxu0 %v686
    %942 = vmatpush1.bf16.msra.mxu0 %v685
    %943 = vmatprep.subr.bf16.mxu0 %v688
    %944 = vmatpush1.bf16.msra.mxu0 %v687
    %945 = vmatprep.subr.bf16.mxu0 %v690
    %946 = vmatpush1.bf16.msra.mxu0 %v689
    %947 = vmatprep.subr.bf16.mxu0 %v692
    %948 = vmatpush1.bf16.msra.mxu0 %v691
    %949 = vmatprep.subr.bf16.mxu0 %v694
    %950 = vmatpush1.bf16.msra.mxu0 %v693
    %951 = vmatprep.mubr.bf16.mxu0 %v259
    %952 = vmatmul.mubr.bf16.gmra.mrb[0].mxu0 %v245
    %v953 = vpop.f32.mrb[0].mxu0
    %v954 = vadd.f32 %v214, %v953
    %v955 = vpop.f32.mrb[0].mxu0
    %v956 = vadd.f32 %v218, %v955
    %v957 = vpop.f32.mrb[0].mxu0
    %v958 = vpop.f32.mrb[0].mxu0
    %959 = vdwg.mxu0
    %960 = vmatprep.subr.bf16.mxu0 %v696
    %961 = vmatpush1.bf16.msra.mxu0 %v695
    %962 = vmatprep.subr.bf16.mxu0 %v698
    %963 = vmatpush1.bf16.msra.mxu0 %v697
    %964 = vmatprep.subr.bf16.mxu0 %v700
    %965 = vmatpush1.bf16.msra.mxu0 %v699
    %966 = vmatprep.subr.bf16.mxu0 %v702
    %967 = vmatpush1.bf16.msra.mxu0 %v701
    %968 = vmatprep.subr.bf16.mxu0 %v704
    %969 = vmatpush1.bf16.msra.mxu0 %v703
    %970 = vmatprep.subr.bf16.mxu0 %v706
    %971 = vmatpush1.bf16.msra.mxu0 %v705
    %972 = vmatprep.subr.bf16.mxu0 %v708
    %973 = vmatpush1.bf16.msra.mxu0 %v707
    %974 = vmatprep.subr.bf16.mxu0 %v710
    %975 = vmatpush1.bf16.msra.mxu0 %v709
    %976 = vmatprep.subr.bf16.mxu0 %v712
    %977 = vmatpush1.bf16.msra.mxu0 %v711
    %978 = vmatprep.subr.bf16.mxu0 %v714
    %979 = vmatpush1.bf16.msra.mxu0 %v713
    %980 = vmatprep.subr.bf16.mxu0 %v716
    %981 = vmatpush1.bf16.msra.mxu0 %v715
    %982 = vmatprep.subr.bf16.mxu0 %v718
    %983 = vmatpush1.bf16.msra.mxu0 %v717
    %984 = vmatprep.subr.bf16.mxu0 %v720
    %985 = vmatpush1.bf16.msra.mxu0 %v719
    %986 = vmatprep.subr.bf16.mxu0 %v722
    %987 = vmatpush1.bf16.msra.mxu0 %v721
    %988 = vmatprep.subr.bf16.mxu0 %v724
    %989 = vmatpush1.bf16.msra.mxu0 %v723
    %990 = vmatprep.subr.bf16.mxu0 %v726
    %991 = vmatpush1.bf16.msra.mxu0 %v725
    %992 = vmatprep.mubr.bf16.mxu0 %v269
    %993 = vmatmul.mubr.bf16.gmra.mrb[0].mxu0 %v267
    %v994 = vpop.f32.mrb[0].mxu0
    %v995 = vadd.f32 %v954, %v994
    %v996 = vpop.f32.mrb[0].mxu0
    %v997 = vadd.f32 %v956, %v996
    %v998 = vpop.f32.mrb[0].mxu0
    %v999 = vpop.f32.mrb[0].mxu0
    %1000 = vdwg.mxu0
    %1001 = vmatprep.subr.bf16.mxu0 %v728
    %1002 = vmatpush1.bf16.msra.mxu0 %v727
    %1003 = vmatprep.subr.bf16.mxu0 %v730
    %1004 = vmatpush1.bf16.msra.mxu0 %v729
    %1005 = vmatprep.subr.bf16.mxu0 %v732
    %1006 = vmatpush1.bf16.msra.mxu0 %v731
    %1007 = vmatprep.subr.bf16.mxu0 %v734
    %1008 = vmatpush1.bf16.msra.mxu0 %v733
    %1009 = vmatprep.subr.bf16.mxu0 %v736
    %1010 = vmatpush1.bf16.msra.mxu0 %v735
    %1011 = vmatprep.subr.bf16.mxu0 %v738
    %1012 = vmatpush1.bf16.msra.mxu0 %v737
    %1013 = vmatprep.subr.bf16.mxu0 %v740
    %1014 = vmatpush1.bf16.msra.mxu0 %v739
    %1015 = vmatprep.subr.bf16.mxu0 %v742
    %1016 = vmatpush1.bf16.msra.mxu0 %v741
    %1017 = vmatprep.subr.bf16.mxu0 %v744
    %1018 = vmatpush1.bf16.msra.mxu0 %v743
    %1019 = vmatprep.subr.bf16.mxu0 %v746
    %1020 = vmatpush1.bf16.msra.mxu0 %v745
    %1021 = vmatprep.subr.bf16.mxu0 %v748
    %1022 = vmatpush1.bf16.msra.mxu0 %v747
    %1023 = vmatprep.subr.bf16.mxu0 %v750
    %1024 = vmatpush1.bf16.msra.mxu0 %v749
    %1025 = vmatprep.subr.bf16.mxu0 %v752
    %1026 = vmatpush1.bf16.msra.mxu0 %v751
    %1027 = vmatprep.subr.bf16.mxu0 %v754
    %1028 = vmatpush1.bf16.msra.mxu0 %v753
    %1029 = vmatprep.subr.bf16.mxu0 %v756
    %1030 = vmatpush1.bf16.msra.mxu0 %v755
    %1031 = vmatprep.subr.bf16.mxu0 %v758
    %1032 = vmatpush1.bf16.msra.mxu0 %v757
    %1033 = vmatprep.mubr.bf16.mxu0 %v266
    %1034 = vmatmul.mubr.bf16.gmra.mrb[0].mxu0 %v252
    %v1035 = vpop.f32.mrb[0].mxu0
    %v1036 = vadd.f32 %v995, %v1035
    %v1037 = vpop.f32.mrb[0].mxu0
    %v1038 = vadd.f32 %v997, %v1037
    %v1039 = vpop.f32.mrb[0].mxu0
    %v1040 = vpop.f32.mrb[0].mxu0
    %1041 = vdwg.mxu0
    %1042 = vmatprep.subr.bf16.mxu0 %v760
    %1043 = vmatpush1.bf16.msra.mxu0 %v759
    %1044 = vmatprep.subr.bf16.mxu0 %v762
    %1045 = vmatpush1.bf16.msra.mxu0 %v761
    %1046 = vmatprep.subr.bf16.mxu0 %v764
    %1047 = vmatpush1.bf16.msra.mxu0 %v763
    %1048 = vmatprep.subr.bf16.mxu0 %v766
    %1049 = vmatpush1.bf16.msra.mxu0 %v765
    %1050 = vmatprep.subr.bf16.mxu0 %v768
    %1051 = vmatpush1.bf16.msra.mxu0 %v767
    %1052 = vmatprep.subr.bf16.mxu0 %v770
    %1053 = vmatpush1.bf16.msra.mxu0 %v769
    %1054 = vmatprep.subr.bf16.mxu0 %v772
    %1055 = vmatpush1.bf16.msra.mxu0 %v771
    %1056 = vmatprep.subr.bf16.mxu0 %v774
    %1057 = vmatpush1.bf16.msra.mxu0 %v773
    %1058 = vmatprep.subr.bf16.mxu0 %v776
    %1059 = vmatpush1.bf16.msra.mxu0 %v775
    %1060 = vmatprep.subr.bf16.mxu0 %v778
    %1061 = vmatpush1.bf16.msra.mxu0 %v777
    %1062 = vmatprep.subr.bf16.mxu0 %v780
    %1063 = vmatpush1.bf16.msra.mxu0 %v779
    %1064 = vmatprep.subr.bf16.mxu0 %v782
    %1065 = vmatpush1.bf16.msra.mxu0 %v781
    %1066 = vmatprep.subr.bf16.mxu0 %v784
    %1067 = vmatpush1.bf16.msra.mxu0 %v783
    %1068 = vmatprep.subr.bf16.mxu0 %v786
    %1069 = vmatpush1.bf16.msra.mxu0 %v785
    %1070 = vmatprep.subr.bf16.mxu0 %v788
    %1071 = vmatpush1.bf16.msra.mxu0 %v787
    %1072 = vmatprep.subr.bf16.mxu0 %v790
    %1073 = vmatpush1.bf16.msra.mxu0 %v789
    %1074 = vmatprep.mubr.bf16.mxu0 %v270
    %1075 = vmatmul.mubr.bf16.gmra.mrb[0].mxu0 %v268
    %v1076 = vpop.f32.mrb[0].mxu0
    %v1077 = vadd.f32 %v1036, %v1076
    %v1078 = vpop.f32.mrb[0].mxu0
    %v1079 = vadd.f32 %v1038, %v1078
    %v1080 = vpop.f32.mrb[0].mxu0
    %v1081 = vpop.f32.mrb[0].mxu0
    %1082 = vdwg.mxu0
    %vm1083 = vcmp.gt.f32.partialorder %v1077, 0.0
    %vm1084 = vcmp.gt.f32.partialorder %v1079, 0.0
    %v1085 = vmul.f32 %v1077, 0.01
    %v1086 = vmul.f32 %v1079, 0.01
    %v1087 = vsel %vm1083, %v1077, %v1085
    %v1088 = vsel %vm1084, %v1079, %v1086
    %v1089 = vld [vmem:[%s1] sm:$0x3]
    %v1090 = vld [vmem:[%s4] sm:$0xf]
    %v1091 = vld [vmem:[%s4 + $0x4] sm:$0xf]
    %v1092 = vld [vmem:[%s4 + $0x8] sm:$0xf]
    %v1093 = vld [vmem:[%s4 + $0xc] sm:$0xf]
    %v1094 = vld [vmem:[%s4 + $0x10] sm:$0xf]
    %v1095 = vld [vmem:[%s4 + $0x14] sm:$0xf]
    %v1096 = vld [vmem:[%s4 + $0x18] sm:$0xf]
    %v1097 = vld [vmem:[%s4 + $0x1c] sm:$0xf]
    %v1098 = vld [vmem:[%s4 + $0x20] sm:$0xf]
    %v1099 = vld [vmem:[%s4 + $0x24] sm:$0xf]
    %v1100 = vld [vmem:[%s4 + $0x28] sm:$0xf]
    %v1101 = vld [vmem:[%s4 + $0x2c] sm:$0xf]
    %v1102 = vld [vmem:[%s4 + $0x30] sm:$0xf]
    %v1103 = vld [vmem:[%s4 + $0x34] sm:$0xf]
    %v1104 = vld [vmem:[%s4 + $0x38] sm:$0xf]
    %v1105 = vld [vmem:[%s4 + $0x3c] sm:$0xf]
    %v1106 = vld [vmem:[%s4 + $0x40] sm:$0xf]
    %v1107 = vld [vmem:[%s4 + $0x44] sm:$0xf]
    %v1108 = vld [vmem:[%s4 + $0x48] sm:$0xf]
    %v1109 = vld [vmem:[%s4 + $0x4c] sm:$0xf]
    %v1110 = vld [vmem:[%s4 + $0x50] sm:$0xf]
    %v1111 = vld [vmem:[%s4 + $0x54] sm:$0xf]
    %v1112 = vld [vmem:[%s4 + $0x58] sm:$0xf]
    %v1113 = vld [vmem:[%s4 + $0x5c] sm:$0xf]
    %v1114 = vld [vmem:[%s4 + $0x60] sm:$0xf]
    %v1115 = vld [vmem:[%s4 + $0x64] sm:$0xf]
    %v1116 = vld [vmem:[%s4 + $0x68] sm:$0xf]
    %v1117 = vld [vmem:[%s4 + $0x6c] sm:$0xf]
    %v1118 = vld [vmem:[%s4 + $0x70] sm:$0xf]
    %v1119 = vld [vmem:[%s4 + $0x74] sm:$0xf]
    %v1120 = vld [vmem:[%s4 + $0x78] sm:$0xf]
    %v1121 = vld [vmem:[%s4 + $0x7c] sm:$0xf]
    %v1122 = vld [vmem:[%s5] sm:$0x1]
    %v1123 = vld [vmem:[%s6] sm:$0xff]
    %v1124 = vld [vmem:[%s6 + $0x8] sm:$0xff]
    %v1125 = vld [vmem:[%s6 + $0x10] sm:$0xff]
    %v1126 = vld [vmem:[%s6 + $0x18] sm:$0xff]
    %v1127 = vld [vmem:[%s6 + $0x20] sm:$0xff]
    %v1128 = vld [vmem:[%s6 + $0x28] sm:$0xff]
    %v1129 = vld [vmem:[%s6 + $0x30] sm:$0xff]
    %v1130 = vld [vmem:[%s6 + $0x38] sm:$0xff]
    %v1131 = vld [vmem:[%s7] sm:$0x3]
    %v1132 = vld [vmem:[%s8] sm:$0xf]
    %v1133 = vld [vmem:[%s8 + $0x4] sm:$0xf]
    %v1134 = vld [vmem:[%s8 + $0x8] sm:$0xf]
    %v1135 = vld [vmem:[%s8 + $0xc] sm:$0xf]
    %v1136 = vld [vmem:[%s8 + $0x10] sm:$0xf]
    %v1137 = vld [vmem:[%s8 + $0x14] sm:$0xf]
    %v1138 = vld [vmem:[%s8 + $0x18] sm:$0xf]
    %v1139 = vld [vmem:[%s8 + $0x1c] sm:$0xf]
    %v1140 = vld [vmem:[%s8 + $0x20] sm:$0xf]
    %v1141 = vld [vmem:[%s8 + $0x24] sm:$0xf]
    %v1142 = vld [vmem:[%s8 + $0x28] sm:$0xf]
    %v1143 = vld [vmem:[%s8 + $0x2c] sm:$0xf]
    %v1144 = vld [vmem:[%s8 + $0x30] sm:$0xf]
    %v1145 = vld [vmem:[%s8 + $0x34] sm:$0xf]
    %v1146 = vld [vmem:[%s8 + $0x38] sm:$0xf]
    %v1147 = vld [vmem:[%s8 + $0x3c] sm:$0xf]
    %v1148 = vld [vmem:[%s9] sm:$0x1]
    %v1149 = vld [vmem:[%s10] sm:$0xff]
    %v1150 = vld [vmem:[%s10 + $0x8] sm:$0xff]
    %v1151 = vld [vmem:[%s10 + $0x10] sm:$0xff]
    %v1152 = vld [vmem:[%s10 + $0x18] sm:$0xff]
    %v1153 = vld [vmem:[%s10 + $0x20] sm:$0xff]
    %v1154 = vld [vmem:[%s10 + $0x28] sm:$0xff]
    %v1155 = vld [vmem:[%s10 + $0x30] sm:$0xff]
    %v1156 = vld [vmem:[%s10 + $0x38] sm:$0xff]
    %v1157 = vld [vmem:[%s11] sm:$0x3]
    %v1158 = vpack.c.bf16 %v1087, %v1087
    %v1159 = vpack.c.bf16 %v1088, %v1088
    %v1161 = vlaneseq
    %v1162 = vshrl.u32 %v1161, 7
    %v1163 = vsub.s32 0, %v1162
    %v1164 = vrot.slane %v1122, %v1163
    %v1198 = vunpack.c.l.b16 %v1090
    %v1199 = vunpack.c.l.b16 %v1091
    %v1200 = vunpack.c.l.b16 %v1092
    %v1201 = vunpack.c.l.b16 %v1093
    %v1202 = vunpack.c.l.b16 %v1094
    %v1203 = vunpack.c.l.b16 %v1095
    %v1204 = vunpack.c.l.b16 %v1096
    %v1205 = vunpack.c.l.b16 %v1097
    %v1206 = vunpack.c.l.b16 %v1098
    %v1207 = vunpack.c.l.b16 %v1099
    %v1208 = vunpack.c.l.b16 %v1100
    %v1209 = vunpack.c.l.b16 %v1101
    %v1210 = vunpack.c.l.b16 %v1102
    %v1211 = vunpack.c.l.b16 %v1103
    %v1212 = vunpack.c.l.b16 %v1104
    %v1213 = vunpack.c.l.b16 %v1105
    %v1214 = vunpack.c.l.b16 %v1106
    %v1215 = vunpack.c.l.b16 %v1107
    %v1216 = vunpack.c.l.b16 %v1108
    %v1217 = vunpack.c.l.b16 %v1109
    %v1218 = vunpack.c.l.b16 %v1110
    %v1219 = vunpack.c.l.b16 %v1111
    %v1220 = vunpack.c.l.b16 %v1112
    %v1221 = vunpack.c.l.b16 %v1113
    %v1222 = vunpack.c.l.b16 %v1114
    %v1223 = vunpack.c.l.b16 %v1115
    %v1224 = vunpack.c.l.b16 %v1116
    %v1225 = vunpack.c.l.b16 %v1117
    %v1226 = vunpack.c.l.b16 %v1118
    %v1227 = vunpack.c.l.b16 %v1119
    %v1228 = vunpack.c.l.b16 %v1120
    %v1229 = vunpack.c.l.b16 %v1121
    %v1230 = vpack.c.b16 %v1199, %v1198
    %v1231 = vpack.c.b16 %v1201, %v1200
    %v1232 = vpack.c.b16 %v1203, %v1202
    %v1233 = vpack.c.b16 %v1205, %v1204
    %v1234 = vpack.c.b16 %v1207, %v1206
    %v1235 = vpack.c.b16 %v1209, %v1208
    %v1236 = vpack.c.b16 %v1211, %v1210
    %v1237 = vpack.c.b16 %v1213, %v1212
    %v1238 = vpack.c.b16 %v1215, %v1214
    %v1239 = vpack.c.b16 %v1217, %v1216
    %v1240 = vpack.c.b16 %v1219, %v1218
    %v1241 = vpack.c.b16 %v1221, %v1220
    %v1242 = vpack.c.b16 %v1223, %v1222
    %v1243 = vpack.c.b16 %v1225, %v1224
    %v1244 = vpack.c.b16 %v1227, %v1226
    %v1245 = vpack.c.b16 %v1229, %v1228
    %1262 = vmatprep.subr.bf16.mxu0 0
    %1263 = vmatpush1.bf16.msra.mxu0 %v1230
    %1264 = vmatprep.subr.bf16.mxu0 0
    %1265 = vmatpush1.bf16.msra.mxu0 %v1231
    %1266 = vmatprep.subr.bf16.mxu0 0
    %1267 = vmatpush1.bf16.msra.mxu0 %v1232
    %1268 = vmatprep.subr.bf16.mxu0 0
    %1269 = vmatpush1.bf16.msra.mxu0 %v1233
    %1270 = vmatprep.subr.bf16.mxu0 0
    %1271 = vmatpush1.bf16.msra.mxu0 %v1234
    %1272 = vmatprep.subr.bf16.mxu0 0
    %1273 = vmatpush1.bf16.msra.mxu0 %v1235
    %1274 = vmatprep.subr.bf16.mxu0 0
    %1275 = vmatpush1.bf16.msra.mxu0 %v1236
    %1276 = vmatprep.subr.bf16.mxu0 0
    %1277 = vmatpush1.bf16.msra.mxu0 %v1237
    %1278 = vmatprep.subr.bf16.mxu0 0
    %1279 = vmatpush1.bf16.msra.mxu0 %v1238
    %1280 = vmatprep.subr.bf16.mxu0 0
    %1281 = vmatpush1.bf16.msra.mxu0 %v1239
    %1282 = vmatprep.subr.bf16.mxu0 0
    %1283 = vmatpush1.bf16.msra.mxu0 %v1240
    %1284 = vmatprep.subr.bf16.mxu0 0
    %1285 = vmatpush1.bf16.msra.mxu0 %v1241
    %1286 = vmatprep.subr.bf16.mxu0 0
    %1287 = vmatpush1.bf16.msra.mxu0 %v1242
    %1288 = vmatprep.subr.bf16.mxu0 0
    %1289 = vmatpush1.bf16.msra.mxu0 %v1243
    %1290 = vmatprep.subr.bf16.mxu0 0
    %1291 = vmatpush1.bf16.msra.mxu0 %v1244
    %1292 = vmatprep.subr.bf16.mxu0 0
    %1293 = vmatpush1.bf16.msra.mxu0 %v1245
    %1294 = vmatprep.mubr.bf16.mxu0 %v1159
    %1295 = vmatmul.mubr.bf16.gmra.mrb[0].mxu0 %v1158
    %v1296 = vpop.f32.mrb[0].mxu0
    %v1297 = vadd.f32 %v1164, %v1296
    %v1298 = vpop.f32.mrb[0].mxu0
    %v1299 = vpop.f32.mrb[0].mxu0
    %v1300 = vpop.f32.mrb[0].mxu0
    %1301 = vdwg.mxu0
    %vm1302 = vcmp.gt.f32.partialorder %v1297, 0.0
    %v1303 = vmul.f32 %v1297, 0.01
    %v1304 = vsel %vm1302, %v1297, %v1303
    %v1305 = vpack.c.bf16 %v1304, %v1304
    %v1307 = vlaneseq
    %v1308 = vshrl.u32 %v1307, 7
    %v1309 = vsub.s32 0, %v1308
    %v1310 = vrot.slane %v1131, %v1309
    %v1311 = vlaneseq
    %v1312 = vshrl.u32 %v1311, 7
    %v1313 = vsub.s32 1, %v1312
    %v1314 = vrot.slane %v1131, %v1313
    %v1325 = vunpack.c.l.b16 %v1123
    %v1326 = vunpack.c.h.b16 %v1123
    %v1327 = vunpack.c.l.b16 %v1124
    %v1328 = vunpack.c.h.b16 %v1124
    %v1329 = vunpack.c.l.b16 %v1125
    %v1330 = vunpack.c.h.b16 %v1125
    %v1331 = vunpack.c.l.b16 %v1126
    %v1332 = vunpack.c.h.b16 %v1126
    %v1333 = vunpack.c.l.b16 %v1127
    %v1334 = vunpack.c.h.b16 %v1127
    %v1335 = vunpack.c.l.b16 %v1128
    %v1336 = vunpack.c.h.b16 %v1128
    %v1337 = vunpack.c.l.b16 %v1129
    %v1338 = vunpack.c.h.b16 %v1129
    %v1339 = vunpack.c.l.b16 %v1130
    %v1340 = vunpack.c.h.b16 %v1130
    %v1341 = vpack.c.b16 %v1327, %v1325
    %v1342 = vpack.c.b16 %v1328, %v1326
    %v1343 = vpack.c.b16 %v1331, %v1329
    %v1344 = vpack.c.b16 %v1332, %v1330
    %v1345 = vpack.c.b16 %v1335, %v1333
    %v1346 = vpack.c.b16 %v1336, %v1334
    %v1347 = vpack.c.b16 %v1339, %v1337
    %v1348 = vpack.c.b16 %v1340, %v1338
    %vm1357 = vcmask 523264
    %v1359 = vsel %vm1357, %v1305, 0
    %1361 = vmatprep.subr.bf16.mxu0 %v1342
    %1362 = vmatpush1.bf16.msra.mxu0 %v1341
    %1363 = vmatprep.subr.bf16.mxu0 %v1344
    %1364 = vmatpush1.bf16.msra.mxu0 %v1343
    %1365 = vmatprep.subr.bf16.mxu0 %v1346
    %1366 = vmatpush1.bf16.msra.mxu0 %v1345
    %1367 = vmatprep.subr.bf16.mxu0 %v1348
    %1368 = vmatpush1.bf16.msra.mxu0 %v1347
    %1369 = vmatprep.subr.bf16.mxu0 0
    %1370 = vmatpush1.bf16.msra.mxu0 0
    %1371 = vmatprep.subr.bf16.mxu0 0
    %1372 = vmatpush1.bf16.msra.mxu0 0
    %1373 = vmatprep.subr.bf16.mxu0 0
    %1374 = vmatpush1.bf16.msra.mxu0 0
    %1375 = vmatprep.subr.bf16.mxu0 0
    %1376 = vmatpush1.bf16.msra.mxu0 0
    %1377 = vmatprep.subr.bf16.mxu0 0
    %1378 = vmatpush1.bf16.msra.mxu0 0
    %1379 = vmatprep.subr.bf16.mxu0 0
    %1380 = vmatpush1.bf16.msra.mxu0 0
    %1381 = vmatprep.subr.bf16.mxu0 0
    %1382 = vmatpush1.bf16.msra.mxu0 0
    %1383 = vmatprep.subr.bf16.mxu0 0
    %1384 = vmatpush1.bf16.msra.mxu0 0
    %1385 = vmatprep.subr.bf16.mxu0 0
    %1386 = vmatpush1.bf16.msra.mxu0 0
    %1387 = vmatprep.subr.bf16.mxu0 0
    %1388 = vmatpush1.bf16.msra.mxu0 0
    %1389 = vmatprep.subr.bf16.mxu0 0
    %1390 = vmatpush1.bf16.msra.mxu0 0
    %1391 = vmatprep.subr.bf16.mxu0 0
    %1392 = vmatpush1.bf16.msra.mxu0 0
    %1393 = vmatprep.mubr.bf16.mxu0 0
    %1394 = vmatmul.mubr.bf16.gmra.mrb[0].mxu0 %v1359
    %v1395 = vpop.f32.mrb[0].mxu0
    %v1396 = vadd.f32 %v1310, %v1395
    %v1397 = vpop.f32.mrb[0].mxu0
    %v1398 = vadd.f32 %v1314, %v1397
    %v1399 = vpop.f32.mrb[0].mxu0
    %v1400 = vpop.f32.mrb[0].mxu0
    %1401 = vdwg.mxu0
    %v1402 = vlaneseq
    %v1403 = vand.u32 %v1402, 127
    %v1404 = vadd.s32 %v1403, 128
    %vm1405 = vcmp.ge.s32.totalorder %v1403, 128
    %vm1406 = vcmp.ge.s32.totalorder %v1404, 128
    %v1407 = vmax.f32 %v1396, -20.0
    %v1408 = vmax.f32 %v1398, -20.0
    %v1409 = vmin.f32 %v1407, 2.0
    %v1410 = vmin.f32 %v1408, 2.0
    %v1411 = vsel %vm1405, %v1409, %v1396
    %v1412 = vsel %vm1406, %v1410, %v1398
    %v1413 = vmul.f32 %v1412, 0.5
    %v1414 = vmul.f32 %v1413, 1.442695
    %v1415 = vpow.pop %v1414
    %v1416 = vmul.f32 %v1089, %v1415
    %v1417 = vadd.f32 %v1416, %v1411
    %v1418 = vpack.c.bf16 %v1417, %v1417
    %v1420 = vlaneseq
    %v1421 = vshrl.u32 %v1420, 7
    %v1422 = vsub.s32 0, %v1421
    %v1423 = vrot.slane %v1148, %v1422
    %v1441 = vunpack.c.l.b16 %v1132
    %v1442 = vunpack.c.l.b16 %v1133
    %v1443 = vunpack.c.l.b16 %v1134
    %v1444 = vunpack.c.l.b16 %v1135
    %v1445 = vunpack.c.l.b16 %v1136
    %v1446 = vunpack.c.l.b16 %v1137
    %v1447 = vunpack.c.l.b16 %v1138
    %v1448 = vunpack.c.l.b16 %v1139
    %v1449 = vunpack.c.l.b16 %v1140
    %v1450 = vunpack.c.l.b16 %v1141
    %v1451 = vunpack.c.l.b16 %v1142
    %v1452 = vunpack.c.l.b16 %v1143
    %v1453 = vunpack.c.l.b16 %v1144
    %v1454 = vunpack.c.l.b16 %v1145
    %v1455 = vunpack.c.l.b16 %v1146
    %v1456 = vunpack.c.l.b16 %v1147
    %v1457 = vpack.c.b16 %v1442, %v1441
    %v1458 = vpack.c.b16 %v1444, %v1443
    %v1459 = vpack.c.b16 %v1446, %v1445
    %v1460 = vpack.c.b16 %v1448, %v1447
    %v1461 = vpack.c.b16 %v1450, %v1449
    %v1462 = vpack.c.b16 %v1452, %v1451
    %v1463 = vpack.c.b16 %v1454, %v1453
    %v1464 = vpack.c.b16 %v1456, %v1455
    %1473 = vmatprep.subr.bf16.mxu0 0
    %1474 = vmatpush1.bf16.msra.mxu0 %v1457
    %1475 = vmatprep.subr.bf16.mxu0 0
    %1476 = vmatpush1.bf16.msra.mxu0 %v1458
    %1477 = vmatprep.subr.bf16.mxu0 0
    %1478 = vmatpush1.bf16.msra.mxu0 %v1459
    %1479 = vmatprep.subr.bf16.mxu0 0
    %1480 = vmatpush1.bf16.msra.mxu0 %v1460
    %1481 = vmatprep.subr.bf16.mxu0 0
    %1482 = vmatpush1.bf16.msra.mxu0 %v1461
    %1483 = vmatprep.subr.bf16.mxu0 0
    %1484 = vmatpush1.bf16.msra.mxu0 %v1462
    %1485 = vmatprep.subr.bf16.mxu0 0
    %1486 = vmatpush1.bf16.msra.mxu0 %v1463
    %1487 = vmatprep.subr.bf16.mxu0 0
    %1488 = vmatpush1.bf16.msra.mxu0 %v1464
    %1489 = vmatprep.subr.bf16.mxu0 0
    %1490 = vmatpush1.bf16.msra.mxu0 0
    %1491 = vmatprep.subr.bf16.mxu0 0
    %1492 = vmatpush1.bf16.msra.mxu0 0
    %1493 = vmatprep.subr.bf16.mxu0 0
    %1494 = vmatpush1.bf16.msra.mxu0 0
    %1495 = vmatprep.subr.bf16.mxu0 0
    %1496 = vmatpush1.bf16.msra.mxu0 0
    %1497 = vmatprep.subr.bf16.mxu0 0
    %1498 = vmatpush1.bf16.msra.mxu0 0
    %1499 = vmatprep.subr.bf16.mxu0 0
    %1500 = vmatpush1.bf16.msra.mxu0 0
    %1501 = vmatprep.subr.bf16.mxu0 0
    %1502 = vmatpush1.bf16.msra.mxu0 0
    %1503 = vmatprep.subr.bf16.mxu0 0
    %1504 = vmatpush1.bf16.msra.mxu0 0
    %1505 = vmatprep.mubr.bf16.mxu0 0
    %1506 = vmatmul.mubr.bf16.gmra.mrb[0].mxu0 %v1418
    %v1507 = vpop.f32.mrb[0].mxu0
    %v1508 = vadd.f32 %v1423, %v1507
    %v1509 = vpop.f32.mrb[0].mxu0
    %v1510 = vpop.f32.mrb[0].mxu0
    %v1511 = vpop.f32.mrb[0].mxu0
    %1512 = vdwg.mxu0
    %vm1513 = vcmp.gt.f32.partialorder %v1508, 0.0
    %v1514 = vmul.f32 %v1508, 0.01
    %v1515 = vsel %vm1513, %v1508, %v1514
    %v1516 = vpack.c.bf16 %v1515, %v1515
    %v1518 = vlaneseq
    %v1519 = vshrl.u32 %v1518, 7
    %v1520 = vsub.s32 0, %v1519
    %v1521 = vrot.slane %v1157, %v1520
    %v1522 = vlaneseq
    %v1523 = vshrl.u32 %v1522, 7
    %v1524 = vsub.s32 1, %v1523
    %v1525 = vrot.slane %v1157, %v1524
    %v1536 = vunpack.c.l.b16 %v1149
    %v1537 = vunpack.c.h.b16 %v1149
    %v1538 = vunpack.c.l.b16 %v1150
    %v1539 = vunpack.c.h.b16 %v1150
    %v1540 = vunpack.c.l.b16 %v1151
    %v1541 = vunpack.c.h.b16 %v1151
    %v1542 = vunpack.c.l.b16 %v1152
    %v1543 = vunpack.c.h.b16 %v1152
    %v1544 = vunpack.c.l.b16 %v1153
    %v1545 = vunpack.c.h.b16 %v1153
    %v1546 = vunpack.c.l.b16 %v1154
    %v1547 = vunpack.c.h.b16 %v1154
    %v1548 = vunpack.c.l.b16 %v1155
    %v1549 = vunpack.c.h.b16 %v1155
    %v1550 = vunpack.c.l.b16 %v1156
    %v1551 = vunpack.c.h.b16 %v1156
    %v1552 = vpack.c.b16 %v1538, %v1536
    %v1553 = vpack.c.b16 %v1539, %v1537
    %v1554 = vpack.c.b16 %v1542, %v1540
    %v1555 = vpack.c.b16 %v1543, %v1541
    %v1556 = vpack.c.b16 %v1546, %v1544
    %v1557 = vpack.c.b16 %v1547, %v1545
    %v1558 = vpack.c.b16 %v1550, %v1548
    %v1559 = vpack.c.b16 %v1551, %v1549
    %v1569 = vsel %vm1357, %v1516, 0
    %1571 = vmatprep.subr.bf16.mxu0 %v1553
    %1572 = vmatpush1.bf16.msra.mxu0 %v1552
    %1573 = vmatprep.subr.bf16.mxu0 %v1555
    %1574 = vmatpush1.bf16.msra.mxu0 %v1554
    %1575 = vmatprep.subr.bf16.mxu0 %v1557
    %1576 = vmatpush1.bf16.msra.mxu0 %v1556
    %1577 = vmatprep.subr.bf16.mxu0 %v1559
    %1578 = vmatpush1.bf16.msra.mxu0 %v1558
    %1579 = vmatprep.subr.bf16.mxu0 0
    %1580 = vmatpush1.bf16.msra.mxu0 0
    %1581 = vmatprep.subr.bf16.mxu0 0
    %1582 = vmatpush1.bf16.msra.mxu0 0
    %1583 = vmatprep.subr.bf16.mxu0 0
    %1584 = vmatpush1.bf16.msra.mxu0 0
    %1585 = vmatprep.subr.bf16.mxu0 0
    %1586 = vmatpush1.bf16.msra.mxu0 0
    %1587 = vmatprep.subr.bf16.mxu0 0
    %1588 = vmatpush1.bf16.msra.mxu0 0
    %1589 = vmatprep.subr.bf16.mxu0 0
    %1590 = vmatpush1.bf16.msra.mxu0 0
    %1591 = vmatprep.subr.bf16.mxu0 0
    %1592 = vmatpush1.bf16.msra.mxu0 0
    %1593 = vmatprep.subr.bf16.mxu0 0
    %1594 = vmatpush1.bf16.msra.mxu0 0
    %1595 = vmatprep.subr.bf16.mxu0 0
    %1596 = vmatpush1.bf16.msra.mxu0 0
    %1597 = vmatprep.subr.bf16.mxu0 0
    %1598 = vmatpush1.bf16.msra.mxu0 0
    %1599 = vmatprep.subr.bf16.mxu0 0
    %1600 = vmatpush1.bf16.msra.mxu0 0
    %1601 = vmatprep.subr.bf16.mxu0 0
    %1602 = vmatpush1.bf16.msra.mxu0 0
    %1603 = vmatprep.mubr.bf16.mxu0 0
    %1604 = vmatmul.mubr.bf16.gmra.mrb[0].mxu0 %v1569
    %v1605 = vpop.f32.mrb[0].mxu0
    %v1606 = vadd.f32 %v1521, %v1605
    %v1607 = vpop.f32.mrb[0].mxu0
    %v1608 = vadd.f32 %v1525, %v1607
    %v1609 = vpop.f32.mrb[0].mxu0
    %v1610 = vpop.f32.mrb[0].mxu0
    %1611 = vdwg.mxu0
    %vm1612 = vcmp.gt.f32.partialorder %v1606, 0.0
    %vm1613 = vcmp.gt.f32.partialorder %v1608, 0.0
    %v1614 = vmul.f32 %v1606, 0.01
    %v1615 = vmul.f32 %v1608, 0.01
    %v1616 = vsel %vm1612, %v1606, %v1614
    %v1617 = vsel %vm1613, %v1608, %v1615
    %v1620 = vcombine.low %v1411, %v1412
    %v1622 = vunpack.c.l.s4 1983009808
    %v1623 = vunpack.c.0.s8 %v1622
    %v1624 = vlaneseq
    %v1625 = vshrl.u32 %v1624, 7
    %v1626 = vsub.s32 %v1623, %v1625
    %v1627 = vrot.slane %v1620, %v1626
    %1629 = vst [vmem:[#allocation8] sm:$0xf] %v1627
    %v1630 = vpack.c.bf16 %v1616, %v1616
    %v1631 = vpack.c.bf16 %v1617, %v1617
    %v1632 = vld [vmem:[#allocation5] sm:$0xff]
    %v1633 = vld [vmem:[#allocation5 + $0x8] sm:$0xff]
    %v1634 = vld [vmem:[#allocation5 + $0x10] sm:$0xff]
    %v1635 = vld [vmem:[#allocation5 + $0x18] sm:$0xff]
    %v1636 = vld [vmem:[#allocation5 + $0x20] sm:$0xff]
    %v1637 = vld [vmem:[#allocation5 + $0x28] sm:$0xff]
    %v1638 = vld [vmem:[#allocation5 + $0x30] sm:$0xff]
    %v1639 = vld [vmem:[#allocation5 + $0x38] sm:$0xff]
    %v1640 = vld [vmem:[#allocation5 + $0x40] sm:$0xff]
    %v1641 = vld [vmem:[#allocation5 + $0x48] sm:$0xff]
    %v1642 = vld [vmem:[#allocation5 + $0x50] sm:$0xff]
    %v1643 = vld [vmem:[#allocation5 + $0x58] sm:$0xff]
    %v1644 = vld [vmem:[#allocation5 + $0x60] sm:$0xff]
    %v1645 = vld [vmem:[#allocation5 + $0x68] sm:$0xff]
    %v1646 = vld [vmem:[#allocation5 + $0x70] sm:$0xff]
    %v1647 = vld [vmem:[#allocation5 + $0x78] sm:$0xff]
    %v1648 = vld [vmem:[#allocation5 + $0x80] sm:$0xff]
    %v1649 = vld [vmem:[#allocation5 + $0x88] sm:$0xff]
    %v1650 = vld [vmem:[#allocation5 + $0x90] sm:$0xff]
    %v1651 = vld [vmem:[#allocation5 + $0x98] sm:$0xff]
    %v1652 = vld [vmem:[#allocation5 + $0xa0] sm:$0xff]
    %v1653 = vld [vmem:[#allocation5 + $0xa8] sm:$0xff]
    %v1654 = vld [vmem:[#allocation5 + $0xb0] sm:$0xff]
    %v1655 = vld [vmem:[#allocation5 + $0xb8] sm:$0xff]
    %v1656 = vld [vmem:[#allocation5 + $0xc0] sm:$0xff]
    %v1657 = vld [vmem:[#allocation5 + $0xc8] sm:$0xff]
    %v1658 = vld [vmem:[#allocation5 + $0xd0] sm:$0xff]
    %v1659 = vld [vmem:[#allocation5 + $0xd8] sm:$0xff]
    %v1660 = vld [vmem:[#allocation5 + $0xe0] sm:$0xff]
    %v1661 = vld [vmem:[#allocation5 + $0xe8] sm:$0xff]
    %v1662 = vld [vmem:[#allocation5 + $0xf0] sm:$0xff]
    %v1663 = vld [vmem:[#allocation5 + $0xf8] sm:$0xff]
    %v1664 = vld [vmem:[#allocation5 + $0x100] sm:$0xff]
    %v1665 = vld [vmem:[#allocation5 + $0x108] sm:$0xff]
    %v1666 = vld [vmem:[#allocation5 + $0x110] sm:$0xff]
    %v1667 = vld [vmem:[#allocation5 + $0x118] sm:$0xff]
    %v1668 = vld [vmem:[#allocation5 + $0x120] sm:$0xff]
    %v1669 = vld [vmem:[#allocation5 + $0x128] sm:$0xff]
    %v1670 = vld [vmem:[#allocation5 + $0x130] sm:$0xff]
    %v1671 = vld [vmem:[#allocation5 + $0x138] sm:$0xff]
    %v1672 = vld [vmem:[#allocation5 + $0x140] sm:$0xff]
    %v1673 = vld [vmem:[#allocation5 + $0x148] sm:$0xff]
    %v1674 = vld [vmem:[#allocation5 + $0x150] sm:$0xff]
    %v1675 = vld [vmem:[#allocation5 + $0x158] sm:$0xff]
    %v1676 = vld [vmem:[#allocation5 + $0x160] sm:$0xff]
    %v1677 = vld [vmem:[#allocation5 + $0x168] sm:$0xff]
    %v1678 = vld [vmem:[#allocation5 + $0x170] sm:$0xff]
    %v1679 = vld [vmem:[#allocation5 + $0x178] sm:$0xff]
    %v1680 = vld [vmem:[#allocation5 + $0x180] sm:$0xff]
    %v1681 = vld [vmem:[#allocation5 + $0x188] sm:$0xff]
    %v1682 = vld [vmem:[#allocation5 + $0x190] sm:$0xff]
    %v1683 = vld [vmem:[#allocation5 + $0x198] sm:$0xff]
    %v1684 = vld [vmem:[#allocation5 + $0x1a0] sm:$0xff]
    %v1685 = vld [vmem:[#allocation5 + $0x1a8] sm:$0xff]
    %v1686 = vld [vmem:[#allocation5 + $0x1b0] sm:$0xff]
    %v1687 = vld [vmem:[#allocation5 + $0x1b8] sm:$0xff]
    %v1688 = vld [vmem:[#allocation5 + $0x1c0] sm:$0xff]
    %v1689 = vld [vmem:[#allocation5 + $0x1c8] sm:$0xff]
    %v1690 = vld [vmem:[#allocation5 + $0x1d0] sm:$0xff]
    %v1691 = vld [vmem:[#allocation5 + $0x1d8] sm:$0xff]
    %v1692 = vld [vmem:[#allocation5 + $0x1e0] sm:$0xff]
    %v1693 = vld [vmem:[#allocation5 + $0x1e8] sm:$0xff]
    %v1694 = vld [vmem:[#allocation5 + $0x1f0] sm:$0xff]
    %v1695 = vld [vmem:[#allocation5 + $0x1f8] sm:$0xff]
    %v1696 = vld [vmem:[#allocation5 + $0x200] sm:$0xff]
    %v1697 = vld [vmem:[#allocation5 + $0x208] sm:$0xff]
    %v1698 = vld [vmem:[#allocation5 + $0x210] sm:$0xff]
    %v1699 = vld [vmem:[#allocation5 + $0x218] sm:$0xff]
    %v1700 = vld [vmem:[#allocation5 + $0x220] sm:$0xff]
    %v1701 = vld [vmem:[#allocation5 + $0x228] sm:$0xff]
    %v1702 = vld [vmem:[#allocation5 + $0x230] sm:$0xff]
    %v1703 = vld [vmem:[#allocation5 + $0x238] sm:$0xff]
    %v1704 = vld [vmem:[#allocation5 + $0x240] sm:$0xff]
    %v1705 = vld [vmem:[#allocation5 + $0x248] sm:$0xff]
    %v1706 = vld [vmem:[#allocation5 + $0x250] sm:$0xff]
    %v1707 = vld [vmem:[#allocation5 + $0x258] sm:$0xff]
    %v1708 = vld [vmem:[#allocation5 + $0x260] sm:$0xff]
    %v1709 = vld [vmem:[#allocation5 + $0x268] sm:$0xff]
    %v1710 = vld [vmem:[#allocation5 + $0x270] sm:$0xff]
    %v1711 = vld [vmem:[#allocation5 + $0x278] sm:$0xff]
    %v1712 = vld [vmem:[#allocation5 + $0x280] sm:$0xff]
    %v1713 = vld [vmem:[#allocation5 + $0x288] sm:$0xff]
    %v1714 = vld [vmem:[#allocation5 + $0x290] sm:$0xff]
    %v1715 = vld [vmem:[#allocation5 + $0x298] sm:$0xff]
    %v1716 = vld [vmem:[#allocation5 + $0x2a0] sm:$0xff]
    %v1717 = vld [vmem:[#allocation5 + $0x2a8] sm:$0xff]
    %v1718 = vld [vmem:[#allocation5 + $0x2b0] sm:$0xff]
    %v1719 = vld [vmem:[#allocation5 + $0x2b8] sm:$0xff]
    %v1720 = vld [vmem:[#allocation5 + $0x2c0] sm:$0xff]
    %v1721 = vld [vmem:[#allocation5 + $0x2c8] sm:$0xff]
    %v1722 = vld [vmem:[#allocation5 + $0x2d0] sm:$0xff]
    %v1723 = vld [vmem:[#allocation5 + $0x2d8] sm:$0xff]
    %v1724 = vld [vmem:[#allocation5 + $0x2e0] sm:$0xff]
    %v1725 = vld [vmem:[#allocation5 + $0x2e8] sm:$0xff]
    %v1726 = vld [vmem:[#allocation5 + $0x2f0] sm:$0xff]
    %v1727 = vld [vmem:[#allocation5 + $0x2f8] sm:$0xff]
    %v1728 = vld [vmem:[#allocation5 + $0x300] sm:$0xff]
    %v1729 = vld [vmem:[#allocation5 + $0x308] sm:$0xff]
    %v1730 = vld [vmem:[#allocation5 + $0x310] sm:$0xff]
    %v1731 = vld [vmem:[#allocation5 + $0x318] sm:$0xff]
    %v1732 = vld [vmem:[#allocation5 + $0x320] sm:$0xff]
    %v1733 = vld [vmem:[#allocation5 + $0x328] sm:$0xff]
    %v1734 = vld [vmem:[#allocation5 + $0x330] sm:$0xff]
    %v1735 = vld [vmem:[#allocation5 + $0x338] sm:$0xff]
    %v1736 = vld [vmem:[#allocation5 + $0x340] sm:$0xff]
    %v1737 = vld [vmem:[#allocation5 + $0x348] sm:$0xff]
    %v1738 = vld [vmem:[#allocation5 + $0x350] sm:$0xff]
    %v1739 = vld [vmem:[#allocation5 + $0x358] sm:$0xff]
    %v1740 = vld [vmem:[#allocation5 + $0x360] sm:$0xff]
    %v1741 = vld [vmem:[#allocation5 + $0x368] sm:$0xff]
    %v1742 = vld [vmem:[#allocation5 + $0x370] sm:$0xff]
    %v1743 = vld [vmem:[#allocation5 + $0x378] sm:$0xff]
    %v1744 = vld [vmem:[#allocation5 + $0x380] sm:$0xff]
    %v1745 = vld [vmem:[#allocation5 + $0x388] sm:$0xff]
    %v1746 = vld [vmem:[#allocation5 + $0x390] sm:$0xff]
    %v1747 = vld [vmem:[#allocation5 + $0x398] sm:$0xff]
    %v1748 = vld [vmem:[#allocation5 + $0x3a0] sm:$0xff]
    %v1749 = vld [vmem:[#allocation5 + $0x3a8] sm:$0xff]
    %v1750 = vld [vmem:[#allocation5 + $0x3b0] sm:$0xff]
    %v1751 = vld [vmem:[#allocation5 + $0x3b8] sm:$0xff]
    %v1752 = vld [vmem:[#allocation5 + $0x3c0] sm:$0xff]
    %v1753 = vld [vmem:[#allocation5 + $0x3c8] sm:$0xff]
    %v1754 = vld [vmem:[#allocation5 + $0x3d0] sm:$0xff]
    %v1755 = vld [vmem:[#allocation5 + $0x3d8] sm:$0xff]
    %v1756 = vld [vmem:[#allocation5 + $0x3e0] sm:$0xff]
    %v1757 = vld [vmem:[#allocation5 + $0x3e8] sm:$0xff]
    %v1758 = vld [vmem:[#allocation5 + $0x3f0] sm:$0xff]
    %v1759 = vld [vmem:[#allocation5 + $0x3f8] sm:$0xff]
    %v1760 = vld [vmem:[%s13] sm:$0xff]
    %v1762 = vlaneseq
    %v1763 = vshrl.u32 %v1762, 7
    %v1764 = vsub.s32 0, %v1763
    %v1765 = vrot.slane %v1760, %v1764
    %v1766 = vlaneseq
    %v1767 = vshrl.u32 %v1766, 7
    %v1768 = vsub.s32 1, %v1767
    %v1769 = vrot.slane %v1760, %v1768
    %v1770 = vlaneseq
    %v1771 = vshrl.u32 %v1770, 7
    %v1772 = vsub.s32 2, %v1771
    %v1773 = vrot.slane %v1760, %v1772
    %v1774 = vlaneseq
    %v1775 = vshrl.u32 %v1774, 7
    %v1776 = vsub.s32 3, %v1775
    %v1777 = vrot.slane %v1760, %v1776
    %v1778 = vlaneseq
    %v1779 = vshrl.u32 %v1778, 7
    %v1780 = vsub.s32 4, %v1779
    %v1781 = vrot.slane %v1760, %v1780
    %v1782 = vlaneseq
    %v1783 = vshrl.u32 %v1782, 7
    %v1784 = vsub.s32 5, %v1783
    %v1785 = vrot.slane %v1760, %v1784
    %v1786 = vlaneseq
    %v1787 = vshrl.u32 %v1786, 7
    %v1788 = vsub.s32 6, %v1787
    %v1789 = vrot.slane %v1760, %v1788
    %v1790 = vlaneseq
    %v1791 = vshrl.u32 %v1790, 7
    %v1792 = vsub.s32 7, %v1791
    %v1793 = vrot.slane %v1760, %v1792
    %v1930 = vunpack.c.l.b16 %v1632
    %v1931 = vunpack.c.h.b16 %v1632
    %v1932 = vunpack.c.l.b16 %v1633
    %v1933 = vunpack.c.h.b16 %v1633
    %v1934 = vunpack.c.l.b16 %v1634
    %v1935 = vunpack.c.h.b16 %v1634
    %v1936 = vunpack.c.l.b16 %v1635
    %v1937 = vunpack.c.h.b16 %v1635
    %v1938 = vunpack.c.l.b16 %v1636
    %v1939 = vunpack.c.h.b16 %v1636
    %v1940 = vunpack.c.l.b16 %v1637
    %v1941 = vunpack.c.h.b16 %v1637
    %v1942 = vunpack.c.l.b16 %v1638
    %v1943 = vunpack.c.h.b16 %v1638
    %v1944 = vunpack.c.l.b16 %v1639
    %v1945 = vunpack.c.h.b16 %v1639
    %v1946 = vunpack.c.l.b16 %v1640
    %v1947 = vunpack.c.h.b16 %v1640
    %v1948 = vunpack.c.l.b16 %v1641
    %v1949 = vunpack.c.h.b16 %v1641
    %v1950 = vunpack.c.l.b16 %v1642
    %v1951 = vunpack.c.h.b16 %v1642
    %v1952 = vunpack.c.l.b16 %v1643
    %v1953 = vunpack.c.h.b16 %v1643
    %v1954 = vunpack.c.l.b16 %v1644
    %v1955 = vunpack.c.h.b16 %v1644
    %v1956 = vunpack.c.l.b16 %v1645
    %v1957 = vunpack.c.h.b16 %v1645
    %v1958 = vunpack.c.l.b16 %v1646
    %v1959 = vunpack.c.h.b16 %v1646
    %v1960 = vunpack.c.l.b16 %v1647
    %v1961 = vunpack.c.h.b16 %v1647
    %v1962 = vunpack.c.l.b16 %v1648
    %v1963 = vunpack.c.h.b16 %v1648
    %v1964 = vunpack.c.l.b16 %v1649
    %v1965 = vunpack.c.h.b16 %v1649
    %v1966 = vunpack.c.l.b16 %v1650
    %v1967 = vunpack.c.h.b16 %v1650
    %v1968 = vunpack.c.l.b16 %v1651
    %v1969 = vunpack.c.h.b16 %v1651
    %v1970 = vunpack.c.l.b16 %v1652
    %v1971 = vunpack.c.h.b16 %v1652
    %v1972 = vunpack.c.l.b16 %v1653
    %v1973 = vunpack.c.h.b16 %v1653
    %v1974 = vunpack.c.l.b16 %v1654
    %v1975 = vunpack.c.h.b16 %v1654
    %v1976 = vunpack.c.l.b16 %v1655
    %v1977 = vunpack.c.h.b16 %v1655
    %v1978 = vunpack.c.l.b16 %v1656
    %v1979 = vunpack.c.h.b16 %v1656
    %v1980 = vunpack.c.l.b16 %v1657
    %v1981 = vunpack.c.h.b16 %v1657
    %v1982 = vunpack.c.l.b16 %v1658
    %v1983 = vunpack.c.h.b16 %v1658
    %v1984 = vunpack.c.l.b16 %v1659
    %v1985 = vunpack.c.h.b16 %v1659
    %v1986 = vunpack.c.l.b16 %v1660
    %v1987 = vunpack.c.h.b16 %v1660
    %v1988 = vunpack.c.l.b16 %v1661
    %v1989 = vunpack.c.h.b16 %v1661
    %v1990 = vunpack.c.l.b16 %v1662
    %v1991 = vunpack.c.h.b16 %v1662
    %v1992 = vunpack.c.l.b16 %v1663
    %v1993 = vunpack.c.h.b16 %v1663
    %v1994 = vunpack.c.l.b16 %v1664
    %v1995 = vunpack.c.h.b16 %v1664
    %v1996 = vunpack.c.l.b16 %v1665
    %v1997 = vunpack.c.h.b16 %v1665
    %v1998 = vunpack.c.l.b16 %v1666
    %v1999 = vunpack.c.h.b16 %v1666
    %v2000 = vunpack.c.l.b16 %v1667
    %v2001 = vunpack.c.h.b16 %v1667
    %v2002 = vunpack.c.l.b16 %v1668
    %v2003 = vunpack.c.h.b16 %v1668
    %v2004 = vunpack.c.l.b16 %v1669
    %v2005 = vunpack.c.h.b16 %v1669
    %v2006 = vunpack.c.l.b16 %v1670
    %v2007 = vunpack.c.h.b16 %v1670
    %v2008 = vunpack.c.l.b16 %v1671
    %v2009 = vunpack.c.h.b16 %v1671
    %v2010 = vunpack.c.l.b16 %v1672
    %v2011 = vunpack.c.h.b16 %v1672
    %v2012 = vunpack.c.l.b16 %v1673
    %v2013 = vunpack.c.h.b16 %v1673
    %v2014 = vunpack.c.l.b16 %v1674
    %v2015 = vunpack.c.h.b16 %v1674
    %v2016 = vunpack.c.l.b16 %v1675
    %v2017 = vunpack.c.h.b16 %v1675
    %v2018 = vunpack.c.l.b16 %v1676
    %v2019 = vunpack.c.h.b16 %v1676
    %v2020 = vunpack.c.l.b16 %v1677
    %v2021 = vunpack.c.h.b16 %v1677
    %v2022 = vunpack.c.l.b16 %v1678
    %v2023 = vunpack.c.h.b16 %v1678
    %v2024 = vunpack.c.l.b16 %v1679
    %v2025 = vunpack.c.h.b16 %v1679
    %v2026 = vunpack.c.l.b16 %v1680
    %v2027 = vunpack.c.h.b16 %v1680
    %v2028 = vunpack.c.l.b16 %v1681
    %v2029 = vunpack.c.h.b16 %v1681
    %v2030 = vunpack.c.l.b16 %v1682
    %v2031 = vunpack.c.h.b16 %v1682
    %v2032 = vunpack.c.l.b16 %v1683
    %v2033 = vunpack.c.h.b16 %v1683
    %v2034 = vunpack.c.l.b16 %v1684
    %v2035 = vunpack.c.h.b16 %v1684
    %v2036 = vunpack.c.l.b16 %v1685
    %v2037 = vunpack.c.h.b16 %v1685
    %v2038 = vunpack.c.l.b16 %v1686
    %v2039 = vunpack.c.h.b16 %v1686
    %v2040 = vunpack.c.l.b16 %v1687
    %v2041 = vunpack.c.h.b16 %v1687
    %v2042 = vunpack.c.l.b16 %v1688
    %v2043 = vunpack.c.h.b16 %v1688
    %v2044 = vunpack.c.l.b16 %v1689
    %v2045 = vunpack.c.h.b16 %v1689
    %v2046 = vunpack.c.l.b16 %v1690
    %v2047 = vunpack.c.h.b16 %v1690
    %v2048 = vunpack.c.l.b16 %v1691
    %v2049 = vunpack.c.h.b16 %v1691
    %v2050 = vunpack.c.l.b16 %v1692
    %v2051 = vunpack.c.h.b16 %v1692
    %v2052 = vunpack.c.l.b16 %v1693
    %v2053 = vunpack.c.h.b16 %v1693
    %v2054 = vunpack.c.l.b16 %v1694
    %v2055 = vunpack.c.h.b16 %v1694
    %v2056 = vunpack.c.l.b16 %v1695
    %v2057 = vunpack.c.h.b16 %v1695
    %v2058 = vunpack.c.l.b16 %v1696
    %v2059 = vunpack.c.h.b16 %v1696
    %v2060 = vunpack.c.l.b16 %v1697
    %v2061 = vunpack.c.h.b16 %v1697
    %v2062 = vunpack.c.l.b16 %v1698
    %v2063 = vunpack.c.h.b16 %v1698
    %v2064 = vunpack.c.l.b16 %v1699
    %v2065 = vunpack.c.h.b16 %v1699
    %v2066 = vunpack.c.l.b16 %v1700
    %v2067 = vunpack.c.h.b16 %v1700
    %v2068 = vunpack.c.l.b16 %v1701
    %v2069 = vunpack.c.h.b16 %v1701
    %v2070 = vunpack.c.l.b16 %v1702
    %v2071 = vunpack.c.h.b16 %v1702
    %v2072 = vunpack.c.l.b16 %v1703
    %v2073 = vunpack.c.h.b16 %v1703
    %v2074 = vunpack.c.l.b16 %v1704
    %v2075 = vunpack.c.h.b16 %v1704
    %v2076 = vunpack.c.l.b16 %v1705
    %v2077 = vunpack.c.h.b16 %v1705
    %v2078 = vunpack.c.l.b16 %v1706
    %v2079 = vunpack.c.h.b16 %v1706
    %v2080 = vunpack.c.l.b16 %v1707
    %v2081 = vunpack.c.h.b16 %v1707
    %v2082 = vunpack.c.l.b16 %v1708
    %v2083 = vunpack.c.h.b16 %v1708
    %v2084 = vunpack.c.l.b16 %v1709
    %v2085 = vunpack.c.h.b16 %v1709
    %v2086 = vunpack.c.l.b16 %v1710
    %v2087 = vunpack.c.h.b16 %v1710
    %v2088 = vunpack.c.l.b16 %v1711
    %v2089 = vunpack.c.h.b16 %v1711
    %v2090 = vunpack.c.l.b16 %v1712
    %v2091 = vunpack.c.h.b16 %v1712
    %v2092 = vunpack.c.l.b16 %v1713
    %v2093 = vunpack.c.h.b16 %v1713
    %v2094 = vunpack.c.l.b16 %v1714
    %v2095 = vunpack.c.h.b16 %v1714
    %v2096 = vunpack.c.l.b16 %v1715
    %v2097 = vunpack.c.h.b16 %v1715
    %v2098 = vunpack.c.l.b16 %v1716
    %v2099 = vunpack.c.h.b16 %v1716
    %v2100 = vunpack.c.l.b16 %v1717
    %v2101 = vunpack.c.h.b16 %v1717
    %v2102 = vunpack.c.l.b16 %v1718
    %v2103 = vunpack.c.h.b16 %v1718
    %v2104 = vunpack.c.l.b16 %v1719
    %v2105 = vunpack.c.h.b16 %v1719
    %v2106 = vunpack.c.l.b16 %v1720
    %v2107 = vunpack.c.h.b16 %v1720
    %v2108 = vunpack.c.l.b16 %v1721
    %v2109 = vunpack.c.h.b16 %v1721
    %v2110 = vunpack.c.l.b16 %v1722
    %v2111 = vunpack.c.h.b16 %v1722
    %v2112 = vunpack.c.l.b16 %v1723
    %v2113 = vunpack.c.h.b16 %v1723
    %v2114 = vunpack.c.l.b16 %v1724
    %v2115 = vunpack.c.h.b16 %v1724
    %v2116 = vunpack.c.l.b16 %v1725
    %v2117 = vunpack.c.h.b16 %v1725
    %v2118 = vunpack.c.l.b16 %v1726
    %v2119 = vunpack.c.h.b16 %v1726
    %v2120 = vunpack.c.l.b16 %v1727
    %v2121 = vunpack.c.h.b16 %v1727
    %v2122 = vunpack.c.l.b16 %v1728
    %v2123 = vunpack.c.h.b16 %v1728
    %v2124 = vunpack.c.l.b16 %v1729
    %v2125 = vunpack.c.h.b16 %v1729
    %v2126 = vunpack.c.l.b16 %v1730
    %v2127 = vunpack.c.h.b16 %v1730
    %v2128 = vunpack.c.l.b16 %v1731
    %v2129 = vunpack.c.h.b16 %v1731
    %v2130 = vunpack.c.l.b16 %v1732
    %v2131 = vunpack.c.h.b16 %v1732
    %v2132 = vunpack.c.l.b16 %v1733
    %v2133 = vunpack.c.h.b16 %v1733
    %v2134 = vunpack.c.l.b16 %v1734
    %v2135 = vunpack.c.h.b16 %v1734
    %v2136 = vunpack.c.l.b16 %v1735
    %v2137 = vunpack.c.h.b16 %v1735
    %v2138 = vunpack.c.l.b16 %v1736
    %v2139 = vunpack.c.h.b16 %v1736
    %v2140 = vunpack.c.l.b16 %v1737
    %v2141 = vunpack.c.h.b16 %v1737
    %v2142 = vunpack.c.l.b16 %v1738
    %v2143 = vunpack.c.h.b16 %v1738
    %v2144 = vunpack.c.l.b16 %v1739
    %v2145 = vunpack.c.h.b16 %v1739
    %v2146 = vunpack.c.l.b16 %v1740
    %v2147 = vunpack.c.h.b16 %v1740
    %v2148 = vunpack.c.l.b16 %v1741
    %v2149 = vunpack.c.h.b16 %v1741
    %v2150 = vunpack.c.l.b16 %v1742
    %v2151 = vunpack.c.h.b16 %v1742
    %v2152 = vunpack.c.l.b16 %v1743
    %v2153 = vunpack.c.h.b16 %v1743
    %v2154 = vunpack.c.l.b16 %v1744
    %v2155 = vunpack.c.h.b16 %v1744
    %v2156 = vunpack.c.l.b16 %v1745
    %v2157 = vunpack.c.h.b16 %v1745
    %v2158 = vunpack.c.l.b16 %v1746
    %v2159 = vunpack.c.h.b16 %v1746
    %v2160 = vunpack.c.l.b16 %v1747
    %v2161 = vunpack.c.h.b16 %v1747
    %v2162 = vunpack.c.l.b16 %v1748
    %v2163 = vunpack.c.h.b16 %v1748
    %v2164 = vunpack.c.l.b16 %v1749
    %v2165 = vunpack.c.h.b16 %v1749
    %v2166 = vunpack.c.l.b16 %v1750
    %v2167 = vunpack.c.h.b16 %v1750
    %v2168 = vunpack.c.l.b16 %v1751
    %v2169 = vunpack.c.h.b16 %v1751
    %v2170 = vunpack.c.l.b16 %v1752
    %v2171 = vunpack.c.h.b16 %v1752
    %v2172 = vunpack.c.l.b16 %v1753
    %v2173 = vunpack.c.h.b16 %v1753
    %v2174 = vunpack.c.l.b16 %v1754
    %v2175 = vunpack.c.h.b16 %v1754
    %v2176 = vunpack.c.l.b16 %v1755
    %v2177 = vunpack.c.h.b16 %v1755
    %v2178 = vunpack.c.l.b16 %v1756
    %v2179 = vunpack.c.h.b16 %v1756
    %v2180 = vunpack.c.l.b16 %v1757
    %v2181 = vunpack.c.h.b16 %v1757
    %v2182 = vunpack.c.l.b16 %v1758
    %v2183 = vunpack.c.h.b16 %v1758
    %v2184 = vunpack.c.l.b16 %v1759
    %v2185 = vunpack.c.h.b16 %v1759
    %v2186 = vpack.c.b16 %v1938, %v1930
    %v2187 = vpack.c.b16 %v1939, %v1931
    %v2188 = vpack.c.b16 %v1940, %v1932
    %v2189 = vpack.c.b16 %v1941, %v1933
    %v2190 = vpack.c.b16 %v1942, %v1934
    %v2191 = vpack.c.b16 %v1943, %v1935
    %v2192 = vpack.c.b16 %v1944, %v1936
    %v2193 = vpack.c.b16 %v1945, %v1937
    %v2194 = vpack.c.b16 %v1954, %v1946
    %v2195 = vpack.c.b16 %v1955, %v1947
    %v2196 = vpack.c.b16 %v1956, %v1948
    %v2197 = vpack.c.b16 %v1957, %v1949
    %v2198 = vpack.c.b16 %v1958, %v1950
    %v2199 = vpack.c.b16 %v1959, %v1951
    %v2200 = vpack.c.b16 %v1960, %v1952
    %v2201 = vpack.c.b16 %v1961, %v1953
    %v2202 = vpack.c.b16 %v1970, %v1962
    %v2203 = vpack.c.b16 %v1971, %v1963
    %v2204 = vpack.c.b16 %v1972, %v1964
    %v2205 = vpack.c.b16 %v1973, %v1965
    %v2206 = vpack.c.b16 %v1974, %v1966
    %v2207 = vpack.c.b16 %v1975, %v1967
    %v2208 = vpack.c.b16 %v1976, %v1968
    %v2209 = vpack.c.b16 %v1977, %v1969
    %v2210 = vpack.c.b16 %v1986, %v1978
    %v2211 = vpack.c.b16 %v1987, %v1979
    %v2212 = vpack.c.b16 %v1988, %v1980
    %v2213 = vpack.c.b16 %v1989, %v1981
    %v2214 = vpack.c.b16 %v1990, %v1982
    %v2215 = vpack.c.b16 %v1991, %v1983
    %v2216 = vpack.c.b16 %v1992, %v1984
    %v2217 = vpack.c.b16 %v1993, %v1985
    %v2218 = vpack.c.b16 %v2002, %v1994
    %v2219 = vpack.c.b16 %v2003, %v1995
    %v2220 = vpack.c.b16 %v2004, %v1996
    %v2221 = vpack.c.b16 %v2005, %v1997
    %v2222 = vpack.c.b16 %v2006, %v1998
    %v2223 = vpack.c.b16 %v2007, %v1999
    %v2224 = vpack.c.b16 %v2008, %v2000
    %v2225 = vpack.c.b16 %v2009, %v2001
    %v2226 = vpack.c.b16 %v2018, %v2010
    %v2227 = vpack.c.b16 %v2019, %v2011
    %v2228 = vpack.c.b16 %v2020, %v2012
    %v2229 = vpack.c.b16 %v2021, %v2013
    %v2230 = vpack.c.b16 %v2022, %v2014
    %v2231 = vpack.c.b16 %v2023, %v2015
    %v2232 = vpack.c.b16 %v2024, %v2016
    %v2233 = vpack.c.b16 %v2025, %v2017
    %v2234 = vpack.c.b16 %v2034, %v2026
    %v2235 = vpack.c.b16 %v2035, %v2027
    %v2236 = vpack.c.b16 %v2036, %v2028
    %v2237 = vpack.c.b16 %v2037, %v2029
    %v2238 = vpack.c.b16 %v2038, %v2030
    %v2239 = vpack.c.b16 %v2039, %v2031
    %v2240 = vpack.c.b16 %v2040, %v2032
    %v2241 = vpack.c.b16 %v2041, %v2033
    %v2242 = vpack.c.b16 %v2050, %v2042
    %v2243 = vpack.c.b16 %v2051, %v2043
    %v2244 = vpack.c.b16 %v2052, %v2044
    %v2245 = vpack.c.b16 %v2053, %v2045
    %v2246 = vpack.c.b16 %v2054, %v2046
    %v2247 = vpack.c.b16 %v2055, %v2047
    %v2248 = vpack.c.b16 %v2056, %v2048
    %v2249 = vpack.c.b16 %v2057, %v2049
    %v2250 = vpack.c.b16 %v2066, %v2058
    %v2251 = vpack.c.b16 %v2067, %v2059
    %v2252 = vpack.c.b16 %v2068, %v2060
    %v2253 = vpack.c.b16 %v2069, %v2061
    %v2254 = vpack.c.b16 %v2070, %v2062
    %v2255 = vpack.c.b16 %v2071, %v2063
    %v2256 = vpack.c.b16 %v2072, %v2064
    %v2257 = vpack.c.b16 %v2073, %v2065
    %v2258 = vpack.c.b16 %v2082, %v2074
    %v2259 = vpack.c.b16 %v2083, %v2075
    %v2260 = vpack.c.b16 %v2084, %v2076
    %v2261 = vpack.c.b16 %v2085, %v2077
    %v2262 = vpack.c.b16 %v2086, %v2078
    %v2263 = vpack.c.b16 %v2087, %v2079
    %v2264 = vpack.c.b16 %v2088, %v2080
    %v2265 = vpack.c.b16 %v2089, %v2081
    %v2266 = vpack.c.b16 %v2098, %v2090
    %v2267 = vpack.c.b16 %v2099, %v2091
    %v2268 = vpack.c.b16 %v2100, %v2092
    %v2269 = vpack.c.b16 %v2101, %v2093
    %v2270 = vpack.c.b16 %v2102, %v2094
    %v2271 = vpack.c.b16 %v2103, %v2095
    %v2272 = vpack.c.b16 %v2104, %v2096
    %v2273 = vpack.c.b16 %v2105, %v2097
    %v2274 = vpack.c.b16 %v2114, %v2106
    %v2275 = vpack.c.b16 %v2115, %v2107
    %v2276 = vpack.c.b16 %v2116, %v2108
    %v2277 = vpack.c.b16 %v2117, %v2109
    %v2278 = vpack.c.b16 %v2118, %v2110
    %v2279 = vpack.c.b16 %v2119, %v2111
    %v2280 = vpack.c.b16 %v2120, %v2112
    %v2281 = vpack.c.b16 %v2121, %v2113
    %v2282 = vpack.c.b16 %v2130, %v2122
    %v2283 = vpack.c.b16 %v2131, %v2123
    %v2284 = vpack.c.b16 %v2132, %v2124
    %v2285 = vpack.c.b16 %v2133, %v2125
    %v2286 = vpack.c.b16 %v2134, %v2126
    %v2287 = vpack.c.b16 %v2135, %v2127
    %v2288 = vpack.c.b16 %v2136, %v2128
    %v2289 = vpack.c.b16 %v2137, %v2129
    %v2290 = vpack.c.b16 %v2146, %v2138
    %v2291 = vpack.c.b16 %v2147, %v2139
    %v2292 = vpack.c.b16 %v2148, %v2140
    %v2293 = vpack.c.b16 %v2149, %v2141
    %v2294 = vpack.c.b16 %v2150, %v2142
    %v2295 = vpack.c.b16 %v2151, %v2143
    %v2296 = vpack.c.b16 %v2152, %v2144
    %v2297 = vpack.c.b16 %v2153, %v2145
    %v2298 = vpack.c.b16 %v2162, %v2154
    %v2299 = vpack.c.b16 %v2163, %v2155
    %v2300 = vpack.c.b16 %v2164, %v2156
    %v2301 = vpack.c.b16 %v2165, %v2157
    %v2302 = vpack.c.b16 %v2166, %v2158
    %v2303 = vpack.c.b16 %v2167, %v2159
    %v2304 = vpack.c.b16 %v2168, %v2160
    %v2305 = vpack.c.b16 %v2169, %v2161
    %v2306 = vpack.c.b16 %v2178, %v2170
    %v2307 = vpack.c.b16 %v2179, %v2171
    %v2308 = vpack.c.b16 %v2180, %v2172
    %v2309 = vpack.c.b16 %v2181, %v2173
    %v2310 = vpack.c.b16 %v2182, %v2174
    %v2311 = vpack.c.b16 %v2183, %v2175
    %v2312 = vpack.c.b16 %v2184, %v2176
    %v2313 = vpack.c.b16 %v2185, %v2177
    %2442 = vmatprep.subr.bf16.mxu0 %v2187
    %2443 = vmatpush1.bf16.msra.mxu0 %v2186
    %2444 = vmatprep.subr.bf16.mxu0 %v2195
    %2445 = vmatpush1.bf16.msra.mxu0 %v2194
    %2446 = vmatprep.subr.bf16.mxu0 %v2203
    %2447 = vmatpush1.bf16.msra.mxu0 %v2202
    %2448 = vmatprep.subr.bf16.mxu0 %v2211
    %2449 = vmatpush1.bf16.msra.mxu0 %v2210
    %2450 = vmatprep.subr.bf16.mxu0 %v2219
    %2451 = vmatpush1.bf16.msra.mxu0 %v2218
    %2452 = vmatprep.subr.bf16.mxu0 %v2227
    %2453 = vmatpush1.bf16.msra.mxu0 %v2226
    %2454 = vmatprep.subr.bf16.mxu0 %v2235
    %2455 = vmatpush1.bf16.msra.mxu0 %v2234
    %2456 = vmatprep.subr.bf16.mxu0 %v2243
    %2457 = vmatpush1.bf16.msra.mxu0 %v2242
    %2458 = vmatprep.subr.bf16.mxu0 %v2251
    %2459 = vmatpush1.bf16.msra.mxu0 %v2250
    %2460 = vmatprep.subr.bf16.mxu0 %v2259
    %2461 = vmatpush1.bf16.msra.mxu0 %v2258
    %2462 = vmatprep.subr.bf16.mxu0 %v2267
    %2463 = vmatpush1.bf16.msra.mxu0 %v2266
    %2464 = vmatprep.subr.bf16.mxu0 %v2275
    %2465 = vmatpush1.bf16.msra.mxu0 %v2274
    %2466 = vmatprep.subr.bf16.mxu0 %v2283
    %2467 = vmatpush1.bf16.msra.mxu0 %v2282
    %2468 = vmatprep.subr.bf16.mxu0 %v2291
    %2469 = vmatpush1.bf16.msra.mxu0 %v2290
    %2470 = vmatprep.subr.bf16.mxu0 %v2299
    %2471 = vmatpush1.bf16.msra.mxu0 %v2298
    %2472 = vmatprep.subr.bf16.mxu0 %v2307
    %2473 = vmatpush1.bf16.msra.mxu0 %v2306
    %2474 = vmatprep.mubr.bf16.mxu0 %v1631
    %2475 = vmatmul.mubr.bf16.gmra.mrb[0].mxu0 %v1630
    %v2476 = vpop.f32.mrb[0].mxu0
    %v2477 = vadd.f32 %v1765, %v2476
    %v2478 = vpop.f32.mrb[0].mxu0
    %v2479 = vadd.f32 %v1769, %v2478
    %v2480 = vpop.f32.mrb[0].mxu0
    %v2481 = vpop.f32.mrb[0].mxu0
    %2482 = vdwg.mxu0
    %2483 = vmatprep.subr.bf16.mxu0 %v2189
    %2484 = vmatpush1.bf16.msra.mxu0 %v2188
    %2485 = vmatprep.subr.bf16.mxu0 %v2197
    %2486 = vmatpush1.bf16.msra.mxu0 %v2196
    %2487 = vmatprep.subr.bf16.mxu0 %v2205
    %2488 = vmatpush1.bf16.msra.mxu0 %v2204
    %2489 = vmatprep.subr.bf16.mxu0 %v2213
    %2490 = vmatpush1.bf16.msra.mxu0 %v2212
    %2491 = vmatprep.subr.bf16.mxu0 %v2221
    %2492 = vmatpush1.bf16.msra.mxu0 %v2220
    %2493 = vmatprep.subr.bf16.mxu0 %v2229
    %2494 = vmatpush1.bf16.msra.mxu0 %v2228
    %2495 = vmatprep.subr.bf16.mxu0 %v2237
    %2496 = vmatpush1.bf16.msra.mxu0 %v2236
    %2497 = vmatprep.subr.bf16.mxu0 %v2245
    %2498 = vmatpush1.bf16.msra.mxu0 %v2244
    %2499 = vmatprep.subr.bf16.mxu0 %v2253
    %2500 = vmatpush1.bf16.msra.mxu0 %v2252
    %2501 = vmatprep.subr.bf16.mxu0 %v2261
    %2502 = vmatpush1.bf16.msra.mxu0 %v2260
    %2503 = vmatprep.subr.bf16.mxu0 %v2269
    %2504 = vmatpush1.bf16.msra.mxu0 %v2268
    %2505 = vmatprep.subr.bf16.mxu0 %v2277
    %2506 = vmatpush1.bf16.msra.mxu0 %v2276
    %2507 = vmatprep.subr.bf16.mxu0 %v2285
    %2508 = vmatpush1.bf16.msra.mxu0 %v2284
    %2509 = vmatprep.subr.bf16.mxu0 %v2293
    %2510 = vmatpush1.bf16.msra.mxu0 %v2292
    %2511 = vmatprep.subr.bf16.mxu0 %v2301
    %2512 = vmatpush1.bf16.msra.mxu0 %v2300
    %2513 = vmatprep.subr.bf16.mxu0 %v2309
    %2514 = vmatpush1.bf16.msra.mxu0 %v2308
    %2515 = vmatprep.mubr.bf16.mxu0 %v1631
    %2516 = vmatmul.mubr.bf16.gmra.mrb[0].mxu0 %v1630
    %v2517 = vpop.f32.mrb[0].mxu0
    %v2518 = vadd.f32 %v1773, %v2517
    %v2519 = vpop.f32.mrb[0].mxu0
    %v2520 = vadd.f32 %v1777, %v2519
    %v2521 = vpop.f32.mrb[0].mxu0
    %v2522 = vpop.f32.mrb[0].mxu0
    %2523 = vdwg.mxu0
    %2524 = vmatprep.subr.bf16.mxu0 %v2191
    %2525 = vmatpush1.bf16.msra.mxu0 %v2190
    %2526 = vmatprep.subr.bf16.mxu0 %v2199
    %2527 = vmatpush1.bf16.msra.mxu0 %v2198
    %2528 = vmatprep.subr.bf16.mxu0 %v2207
    %2529 = vmatpush1.bf16.msra.mxu0 %v2206
    %2530 = vmatprep.subr.bf16.mxu0 %v2215
    %2531 = vmatpush1.bf16.msra.mxu0 %v2214
    %2532 = vmatprep.subr.bf16.mxu0 %v2223
    %2533 = vmatpush1.bf16.msra.mxu0 %v2222
    %2534 = vmatprep.subr.bf16.mxu0 %v2231
    %2535 = vmatpush1.bf16.msra.mxu0 %v2230
    %2536 = vmatprep.subr.bf16.mxu0 %v2239
    %2537 = vmatpush1.bf16.msra.mxu0 %v2238
    %2538 = vmatprep.subr.bf16.mxu0 %v2247
    %2539 = vmatpush1.bf16.msra.mxu0 %v2246
    %2540 = vmatprep.subr.bf16.mxu0 %v2255
    %2541 = vmatpush1.bf16.msra.mxu0 %v2254
    %2542 = vmatprep.subr.bf16.mxu0 %v2263
    %2543 = vmatpush1.bf16.msra.mxu0 %v2262
    %2544 = vmatprep.subr.bf16.mxu0 %v2271
    %2545 = vmatpush1.bf16.msra.mxu0 %v2270
    %2546 = vmatprep.subr.bf16.mxu0 %v2279
    %2547 = vmatpush1.bf16.msra.mxu0 %v2278
    %2548 = vmatprep.subr.bf16.mxu0 %v2287
    %2549 = vmatpush1.bf16.msra.mxu0 %v2286
    %2550 = vmatprep.subr.bf16.mxu0 %v2295
    %2551 = vmatpush1.bf16.msra.mxu0 %v2294
    %2552 = vmatprep.subr.bf16.mxu0 %v2303
    %2553 = vmatpush1.bf16.msra.mxu0 %v2302
    %2554 = vmatprep.subr.bf16.mxu0 %v2311
    %2555 = vmatpush1.bf16.msra.mxu0 %v2310
    %2556 = vmatprep.mubr.bf16.mxu0 %v1631
    %2557 = vmatmul.mubr.bf16.gmra.mrb[0].mxu0 %v1630
    %v2558 = vpop.f32.mrb[0].mxu0
    %v2559 = vadd.f32 %v1781, %v2558
    %v2560 = vpop.f32.mrb[0].mxu0
    %v2561 = vadd.f32 %v1785, %v2560
    %v2562 = vpop.f32.mrb[0].mxu0
    %v2563 = vpop.f32.mrb[0].mxu0
    %2564 = vdwg.mxu0
    %2565 = vmatprep.subr.bf16.mxu0 %v2193
    %2566 = vmatpush1.bf16.msra.mxu0 %v2192
    %2567 = vmatprep.subr.bf16.mxu0 %v2201
    %2568 = vmatpush1.bf16.msra.mxu0 %v2200
    %2569 = vmatprep.subr.bf16.mxu0 %v2209
    %2570 = vmatpush1.bf16.msra.mxu0 %v2208
    %2571 = vmatprep.subr.bf16.mxu0 %v2217
    %2572 = vmatpush1.bf16.msra.mxu0 %v2216
    %2573 = vmatprep.subr.bf16.mxu0 %v2225
    %2574 = vmatpush1.bf16.msra.mxu0 %v2224
    %2575 = vmatprep.subr.bf16.mxu0 %v2233
    %2576 = vmatpush1.bf16.msra.mxu0 %v2232
    %2577 = vmatprep.subr.bf16.mxu0 %v2241
    %2578 = vmatpush1.bf16.msra.mxu0 %v2240
    %2579 = vmatprep.subr.bf16.mxu0 %v2249
    %2580 = vmatpush1.bf16.msra.mxu0 %v2248
    %2581 = vmatprep.subr.bf16.mxu0 %v2257
    %2582 = vmatpush1.bf16.msra.mxu0 %v2256
    %2583 = vmatprep.subr.bf16.mxu0 %v2265
    %2584 = vmatpush1.bf16.msra.mxu0 %v2264
    %2585 = vmatprep.subr.bf16.mxu0 %v2273
    %2586 = vmatpush1.bf16.msra.mxu0 %v2272
    %2587 = vmatprep.subr.bf16.mxu0 %v2281
    %2588 = vmatpush1.bf16.msra.mxu0 %v2280
    %2589 = vmatprep.subr.bf16.mxu0 %v2289
    %2590 = vmatpush1.bf16.msra.mxu0 %v2288
    %2591 = vmatprep.subr.bf16.mxu0 %v2297
    %2592 = vmatpush1.bf16.msra.mxu0 %v2296
    %2593 = vmatprep.subr.bf16.mxu0 %v2305
    %2594 = vmatpush1.bf16.msra.mxu0 %v2304
    %2595 = vmatprep.subr.bf16.mxu0 %v2313
    %2596 = vmatpush1.bf16.msra.mxu0 %v2312
    %2597 = vmatprep.mubr.bf16.mxu0 %v1631
    %2598 = vmatmul.mubr.bf16.gmra.mrb[0].mxu0 %v1630
    %v2599 = vpop.f32.mrb[0].mxu0
    %v2600 = vadd.f32 %v1789, %v2599
    %v2601 = vpop.f32.mrb[0].mxu0
    %v2602 = vadd.f32 %v1793, %v2601
    %v2603 = vpop.f32.mrb[0].mxu0
    %v2604 = vpop.f32.mrb[0].mxu0
    %2605 = vdwg.mxu0
    %v2614 = vcombine.low %v2477, %v2479
    %v2615 = vcombine.low %v2518, %v2520
    %v2617 = vunpack.c.l.s4 1983009808
    %v2618 = vunpack.c.0.s8 %v2617
    %v2619 = vlaneseq
    %v2620 = vshrl.u32 %v2619, 7
    %v2621 = vsub.s32 %v2618, %v2620
    %v2622 = vrot.slane %v2614, %v2621
    %v2624 = vunpack.c.l.s4 1983009808
    %v2625 = vunpack.c.0.s8 %v2624
    %v2626 = vlaneseq
    %v2627 = vshrl.u32 %v2626, 7
    %v2628 = vsub.s32 %v2625, %v2627
    %v2629 = vrot.slane %v2615, %v2628
    %v2630 = vcombine.low %v2622, %v2629
    %v2631 = vcombine.low %v2559, %v2561
    %v2632 = vcombine.low %v2600, %v2602
    %v2634 = vunpack.c.l.s4 1983009808
    %v2635 = vunpack.c.0.s8 %v2634
    %v2636 = vlaneseq
    %v2637 = vshrl.u32 %v2636, 7
    %v2638 = vsub.s32 %v2635, %v2637
    %v2639 = vrot.slane %v2631, %v2638
    %v2641 = vunpack.c.l.s4 1983009808
    %v2642 = vunpack.c.0.s8 %v2641
    %v2643 = vlaneseq
    %v2644 = vshrl.u32 %v2643, 7
    %v2645 = vsub.s32 %v2642, %v2644
    %v2646 = vrot.slane %v2632, %v2645
    %v2647 = vcombine.low %v2639, %v2646
    %2650 = vst [vmem:[#allocation7] sm:$0xff] %v2630
    %2651 = vst [vmem:[#allocation7 + $0x8] sm:$0xff] %v2647
    // Predicated region
    $region66: #{tpu_custom_call.1} parent=1 // pred_check
      _
    $region67: #{tpu_custom_call.1} parent=1 // pred_check_branch
      %2653 = sbr.rel (0) target = $region69
    $region68: #{tpu_custom_call.1} parent=1 // pred_region
      %s2655 = ssub.s32 256, 256
      %2656 = vsyncadd [#allocation4], %s2655
      %s2658 = sshll.u32 [#allocation7], 4
      %s2659 = int_to_ptr.vmem [resolvable:$true] %s2658
      %2661 = dma.vmem_to_hbm [thread:$0]  %s2659, 256, %s14, [#allocation4]
    $region69: #{tpu_custom_call.1} parent=1 // pred_fallthru
      _
    // Predicated region
    $region70: #{tpu_custom_call.1} parent=1 // pred_check
      _
    $region71: #{tpu_custom_call.1} parent=1 // pred_check_branch
      %2663 = sbr.rel (0) target = $region73
    $region72: #{tpu_custom_call.1} parent=1 // pred_region
      %s2665 = ssub.s32 64, 64
      %2666 = vsyncadd [#allocation9], %s2665
      %s2668 = sshll.u32 [#allocation8], 4
      %s2669 = int_to_ptr.vmem [resolvable:$true] %s2668
      %2671 = dma.vmem_to_hbm [thread:$0]  %s2669, 64, %s15, [#allocation9]
    $region73: #{tpu_custom_call.1} parent=1 // pred_fallthru
      _
    // Predicated region
    $region74: #{tpu_custom_call.1} parent=1 // pred_check
      _
    $region75: #{tpu_custom_call.1} parent=1 // pred_check_branch
      %2673 = sbr.rel (0) target = $region77
    $region76: #{tpu_custom_call.1} parent=1 // pred_region
      %2674 = dma.done [#allocation4], 256
    $region77: #{tpu_custom_call.1} parent=1 // pred_fallthru
      _
    // Predicated region
    $region78: #{tpu_custom_call.1} parent=1 // pred_check
      _
    $region79: #{tpu_custom_call.1} parent=1 // pred_check_branch
      %2676 = sbr.rel (0) target = $region81
    $region80: #{tpu_custom_call.1} parent=1 // pred_region
      %2677 = dma.done [#allocation9], 64
    $region81: #{tpu_custom_call.1} parent=1 // pred_fallthru
      _
    %2678 = vsyncpa [#allocation3], 1
    %2679 = vsyncpa [#allocation6], 1
    %2680 = vsyncpa [#allocation4], 1
    %2681 = vsyncpa [#allocation9], 1

</llo_original>
